<compile_context>
chip_gen: v7x
topology: tpu7x:2x2x1
jax: 0.10.0
libtpu: 0.0.40
codegen_flags: <defaults>
</compile_context>

<pallas_src>
import jax
import jax.numpy as jnp
import numpy as np
from jax.experimental import pallas as pl
from jax.experimental.pallas import tpu as pltpu

# ----------------------- model hyper-parameters (small) ---------------------
N_HEAD = 2
D_MODEL = 32
D_K = 16
D_V = 16            # NOTE: weight stacking below assumes D_K == D_V
SZ_B = 2
LEN_Q = 8           # len_q == len_k == len_v (self-attention style call)
TEMPERATURE = float(np.power(D_K, 0.5))
LN_EPS = 1e-5


# ------------------------------ Pallas kernel -------------------------------
def mha_kernel(qkv_ref, wproj_ref, wfc_ref, misc_ref,   # inputs (4 DMAs)
               out_ref,                                 # output
               qp_ref, kp_ref, vp_ref):                 # VMEM scratch
    """Entire MHA forward for the whole (tiny) batch in one invocation."""
    # Leading-axis slices of the stacked input slab (free address arithmetic).
    q_in = qkv_ref[0]                    # (B*L, d_model) f32 -- also residual
    k_in = qkv_ref[1]
    v_in = qkv_ref[2]

    # --- per-head Q/K/V projections (2-D MXU dots, per-head weight = leading-
    #     axis slice of the stacked weight slab -> no lane-offset slices).
    #     Results are scattered per (head, batch) into (H*B, L, dk) scratch so
    #     the attention step is a single batched matmul over the stacked axis.
    for h in range(N_HEAD):
        qh = jnp.dot(q_in, wproj_ref[0 * N_HEAD + h],
                     preferred_element_type=jnp.float32)        # (B*L, dk)
        kh = jnp.dot(k_in, wproj_ref[1 * N_HEAD + h],
                     preferred_element_type=jnp.float32)
        vh = jnp.dot(v_in, wproj_ref[2 * N_HEAD + h],
                     preferred_element_type=jnp.float32)
        for b in range(SZ_B):
            rows = slice(b * LEN_Q, (b + 1) * LEN_Q)            # 8-aligned
            s = h * SZ_B + b                                    # (h, b) order
            qp_ref[s] = qh[rows, :]
            kp_ref[s] = kh[rows, :]
            vp_ref[s] = vh[rows, :]

    q_all = qp_ref[...]                  # (H*B, L, dk)
    k_all = kp_ref[...]
    v_all = vp_ref[...]

    # --- batched scores + ONE softmax over all B*H tiles --------------------
    # (temperature already folded into the Q projection weights)
    scores = jnp.einsum('sqd,skd->sqk', q_all, k_all,
                        preferred_element_type=jnp.float32)     # (H*B, L, L)
    scores = scores - jnp.max(scores, axis=-1, keepdims=True)
    p = jnp.exp(scores)
    p = p * pl.reciprocal(jnp.sum(p, axis=-1, keepdims=True))   # exact

    ctx = jnp.einsum('sqk,skd->sqd', p, v_all,
                     preferred_element_type=jnp.float32)        # (H*B, L, dv)

    # --- fc as accumulation over heads + bias + residual + LayerNorm --------
    bias = misc_ref[0]                   # (1, d_model)
    ln_w = misc_ref[1]
    ln_b = misc_ref[2]
    inv_d = 1.0 / D_MODEL

    for b in range(SZ_B):
        rows = slice(b * LEN_Q, (b + 1) * LEN_Q)
        o = q_in[rows, :] + bias                                # residual + b_fc
        for h in range(N_HEAD):
            o = o + jnp.dot(ctx[h * SZ_B + b], wfc_ref[h],
                            preferred_element_type=jnp.float32)  # (L, d_model)

        # LayerNorm: E[x^2] - mean^2, both reductions issued back-to-back.
        s1 = jnp.sum(o, axis=-1, keepdims=True)
        s2 = jnp.sum(o * o, axis=-1, keepdims=True)
        mean = s1 * inv_d
        var = s2 * inv_d - mean * mean
        o = (o - mean) * jax.lax.rsqrt(var + LN_EPS)
        out_ref[rows, :] = (o * ln_w + ln_b).astype(out_ref.dtype)


# ------------------------------ wrapper --------------------------------------
@jax.jit
def multi_head_attention(q, k, v, w_qs, w_ks, w_vs, w_fc, b_fc, ln_w, ln_b):
    sz_b, len_q, d_model = q.shape
    # Kernel assumes self-attention shapes (len_k == len_v == len_q).
    assert k.shape == q.shape and v.shape == q.shape
    assert sz_b == SZ_B and len_q == LEN_Q and d_model == D_MODEL
    assert D_K == D_V  # required for the single stacked projection-weight slab
    n_rows = sz_b * len_q

    # Host/XLA-side layout prep (trace-level, outside the kernel):
    #  * one contiguous (3, B*L, d_model) slab for q/k/v            -> 1 DMA
    #  * per-head projection weights stacked (3*H, d_model, d_k),
    #    1/temperature folded into the Q block                      -> 1 DMA
    #  * per-head fc weights (H, d_v, d_model)                      -> 1 DMA
    #  * b_fc / ln_w / ln_b packed into (3, 1, d_model)             -> 1 DMA
    qkv = jnp.stack([q.reshape(n_rows, d_model),
                     k.reshape(n_rows, d_model),
                     v.reshape(n_rows, d_model)], axis=0)

    wq_s = (w_qs / TEMPERATURE).reshape(N_HEAD, D_K, d_model).transpose(0, 2, 1)
    wk_s = w_ks.reshape(N_HEAD, D_K, d_model).transpose(0, 2, 1)
    wv_s = w_vs.reshape(N_HEAD, D_V, d_model).transpose(0, 2, 1)
    wproj = jnp.concatenate([wq_s, wk_s, wv_s], axis=0)       # (3H, d_model, dk)

    wfc_s = jnp.transpose(w_fc).reshape(N_HEAD, D_V, d_model)  # (H, dv, d_model)
    misc = jnp.stack([b_fc, ln_w, ln_b], axis=0)               # (3, 1, d_model)

    def full(shp):
        return pl.BlockSpec(shp, lambda i: (0,) * len(shp))

    flops = (3 * N_HEAD * 2 * n_rows * d_model * D_K            # q/k/v proj
             + N_HEAD * SZ_B * 2 * LEN_Q * LEN_Q * D_K          # q @ k^T
             + N_HEAD * SZ_B * 2 * LEN_Q * LEN_Q * D_V          # attn @ v
             + N_HEAD * SZ_B * 2 * LEN_Q * D_V * d_model)       # fc
    transcendentals = (N_HEAD * SZ_B * LEN_Q * LEN_Q            # exp
                       + N_HEAD * SZ_B * LEN_Q + n_rows)        # recip + rsqrt
    bytes_accessed = 4 * (qkv.size + wproj.size + wfc_s.size + misc.size
                          + n_rows * d_model)

    out2 = pl.pallas_call(
        mha_kernel,
        out_shape=jax.ShapeDtypeStruct((n_rows, d_model), q.dtype),
        grid_spec=pltpu.PrefetchScalarGridSpec(
            num_scalar_prefetch=0,
            grid=(1,),   # whole problem in one step: no per-grid-step overhead
            in_specs=[
                full(qkv.shape),     # (3, B*L, d_model)
                full(wproj.shape),   # (3H, d_model, dk), Wq pre-scaled
                full(wfc_s.shape),   # (H, dv, d_model)
                full(misc.shape),    # (3, 1, d_model): b_fc, ln_w, ln_b
            ],
            out_specs=pl.BlockSpec((n_rows, d_model), lambda i: (0, 0)),
            scratch_shapes=[
                pltpu.VMEM((N_HEAD * SZ_B, LEN_Q, D_K), jnp.float32),  # Q stack
                pltpu.VMEM((N_HEAD * SZ_B, LEN_Q, D_K), jnp.float32),  # K stack
                pltpu.VMEM((N_HEAD * SZ_B, LEN_Q, D_V), jnp.float32),  # V stack
            ]),
        compiler_params=pltpu.CompilerParams(
            dimension_semantics=("arbitrary",)),
        cost_estimate=pl.CostEstimate(
            flops=flops,
            transcendentals=transcendentals,
            bytes_accessed=bytes_accessed),
    )(qkv, wproj, wfc_s, misc)

    # Free (contiguous) reshape back to the module's (B, L, d_model) layout.
    return out2.reshape(sz_b, len_q, d_model)


# ------------------------------ reference (pure JAX) -------------------------
def reference_forward(q, k, v, w_qs, w_ks, w_vs, w_fc, b_fc, ln_w, ln_b):
    sz_b, len_q, _ = q.shape
    residual = q
    qp = (q @ w_qs.T).reshape(sz_b, len_q, N_HEAD, D_K)
    kp = (k @ w_ks.T).reshape(sz_b, k.shape[1], N_HEAD, D_K)
    vp = (v @ w_vs.T).reshape(sz_b, v.shape[1], N_HEAD, D_V)
    qp = jnp.transpose(qp, (2, 0, 1, 3)).reshape(-1, len_q, D_K)
    kp = jnp.transpose(kp, (2, 0, 1, 3)).reshape(-1, k.shape[1], D_K)
    vp = jnp.transpose(vp, (2, 0, 1, 3)).reshape(-1, v.shape[1], D_V)
    attn = jnp.einsum('bqd,bkd->bqk', qp, kp) / TEMPERATURE
    attn = jax.nn.softmax(attn, axis=2)
    out = jnp.einsum('bqk,bkd->bqd', attn, vp)
    out = out.reshape(N_HEAD, sz_b, len_q, D_V)
    out = jnp.transpose(out, (1, 2, 0, 3)).reshape(sz_b, len_q, -1)
    out = out @ w_fc.T + b_fc[0]
    out = out + residual
    mean = jnp.mean(out, axis=-1, keepdims=True)
    var = jnp.var(out, axis=-1, keepdims=True)
    out = (out - mean) / jnp.sqrt(var + LN_EPS)
    return out * ln_w[0] + ln_b[0]


# ------------------------------ main -----------------------------------------
if __name__ == "__main__":
    key = jax.random.PRNGKey(0)
    k_q, k_k, k_v, k_wq, k_wk, k_wv, k_wfc, k_bfc = jax.random.split(key, 8)

    q = jax.random.normal(k_q, (SZ_B, LEN_Q, D_MODEL), jnp.float32)
    k = jax.random.normal(k_k, (SZ_B, LEN_Q, D_MODEL), jnp.float32)
    v = jax.random.normal(k_v, (SZ_B, LEN_Q, D_MODEL), jnp.float32)

    # Parameter init matching the module's __init__ distributions.
    std_qk = np.sqrt(2.0 / (D_MODEL + D_K))
    std_v = np.sqrt(2.0 / (D_MODEL + D_V))
    std_fc = np.sqrt(2.0 / (N_HEAD * D_V + D_MODEL))   # xavier_normal_
    w_qs = std_qk * jax.random.normal(k_wq, (N_HEAD * D_K, D_MODEL), jnp.float32)
    w_ks = std_qk * jax.random.normal(k_wk, (N_HEAD * D_K, D_MODEL), jnp.float32)
    w_vs = std_v * jax.random.normal(k_wv, (N_HEAD * D_V, D_MODEL), jnp.float32)
    w_fc = std_fc * jax.random.normal(k_wfc, (D_MODEL, N_HEAD * D_V), jnp.float32)
    bound = 1.0 / np.sqrt(N_HEAD * D_V)
    b_fc = jax.random.uniform(k_bfc, (1, D_MODEL), jnp.float32, -bound, bound)
    ln_w = jnp.ones((1, D_MODEL), jnp.float32)
    ln_b = jnp.zeros((1, D_MODEL), jnp.float32)

    out = multi_head_attention(q, k, v, w_qs, w_ks, w_vs, w_fc, b_fc, ln_w, ln_b)
    out = jax.block_until_ready(out)

    ref = reference_forward(q, k, v, w_qs, w_ks, w_vs, w_fc, b_fc, ln_w, ln_b)
    np.testing.assert_allclose(np.asarray(out), np.asarray(ref),
                               rtol=1e-5, atol=2e-5)

    print("KERNEL_OK")
</pallas_src>

<mosaic_0001>
module attributes {stable_mosaic.version = 11 : i64} {
  func.func @mha_kernel(%arg0: i32, %arg1: memref<3x16x32xf32, #tpu.memory_space<vmem>>, %arg2: memref<6x32x16xf32, #tpu.memory_space<vmem>>, %arg3: memref<2x16x32xf32, #tpu.memory_space<vmem>>, %arg4: memref<3x1x32xf32, #tpu.memory_space<vmem>>, %arg5: memref<16x32xf32, #tpu.memory_space<vmem>>, %arg6: memref<4x8x16xf32, #tpu.memory_space<vmem>>, %arg7: memref<4x8x16xf32, #tpu.memory_space<vmem>>, %arg8: memref<4x8x16xf32, #tpu.memory_space<vmem>>) attributes {dimension_semantics = [#tpu.dimension_semantics<arbitrary>], iteration_bounds = array<i64: 1>, scalar_prefetch = 0 : i64, scratch_operands = 3 : i64, tpu.core_type = #tpu.core_type<tc>, window_params = [{pipeline_mode = #tpu.pipeline_mode<synchronous>, transform_indices = @transform_0, window_bounds = array<i64: 3, 16, 32>}, {pipeline_mode = #tpu.pipeline_mode<synchronous>, transform_indices = @transform_1, window_bounds = array<i64: 6, 32, 16>}, {pipeline_mode = #tpu.pipeline_mode<synchronous>, transform_indices = @transform_2, window_bounds = array<i64: 2, 16, 32>}, {pipeline_mode = #tpu.pipeline_mode<synchronous>, transform_indices = @transform_3, window_bounds = array<i64: 3, 1, 32>}, {pipeline_mode = #tpu.pipeline_mode<synchronous>, transform_indices = @transform_4, window_bounds = array<i64: 16, 32>}]} {
    %c0 = arith.constant 0 : index
    %c0_0 = arith.constant 0 : index
    %c0_1 = arith.constant 0 : index
    %0 = vector.load %arg1[%c0, %c0_0, %c0_1] : memref<3x16x32xf32, #tpu.memory_space<vmem>>, vector<1x16x32xf32>
    %1 = vector.shape_cast %0 : vector<1x16x32xf32> to vector<16x32xf32>
    %c1 = arith.constant 1 : index
    %c0_2 = arith.constant 0 : index
    %c0_3 = arith.constant 0 : index
    %2 = vector.load %arg1[%c1, %c0_2, %c0_3] : memref<3x16x32xf32, #tpu.memory_space<vmem>>, vector<1x16x32xf32>
    %3 = vector.shape_cast %2 : vector<1x16x32xf32> to vector<16x32xf32>
    %c2 = arith.constant 2 : index
    %c0_4 = arith.constant 0 : index
    %c0_5 = arith.constant 0 : index
    %4 = vector.load %arg1[%c2, %c0_4, %c0_5] : memref<3x16x32xf32, #tpu.memory_space<vmem>>, vector<1x16x32xf32>
    %5 = vector.shape_cast %4 : vector<1x16x32xf32> to vector<16x32xf32>
    %c0_6 = arith.constant 0 : index
    %c0_7 = arith.constant 0 : index
    %c0_8 = arith.constant 0 : index
    %6 = vector.load %arg2[%c0_6, %c0_7, %c0_8] : memref<6x32x16xf32, #tpu.memory_space<vmem>>, vector<1x32x16xf32>
    %7 = vector.shape_cast %6 : vector<1x32x16xf32> to vector<32x16xf32>
    %cst = arith.constant dense<0.000000e+00> : vector<16x16xf32>
    %8 = tpu.matmul %1, %7, %cst {dimension_numbers = #tpu.dot_dimension_numbers<[1], [0], [0], [1], [0, 0, 1, 1], [], []>} : vector<16x32xf32>, vector<32x16xf32>, vector<16x16xf32> -> vector<16x16xf32>
    %c2_9 = arith.constant 2 : index
    %c0_10 = arith.constant 0 : index
    %c0_11 = arith.constant 0 : index
    %9 = vector.load %arg2[%c2_9, %c0_10, %c0_11] : memref<6x32x16xf32, #tpu.memory_space<vmem>>, vector<1x32x16xf32>
    %10 = vector.shape_cast %9 : vector<1x32x16xf32> to vector<32x16xf32>
    %cst_12 = arith.constant dense<0.000000e+00> : vector<16x16xf32>
    %11 = tpu.matmul %3, %10, %cst_12 {dimension_numbers = #tpu.dot_dimension_numbers<[1], [0], [0], [1], [0, 0, 1, 1], [], []>} : vector<16x32xf32>, vector<32x16xf32>, vector<16x16xf32> -> vector<16x16xf32>
    %c4 = arith.constant 4 : index
    %c0_13 = arith.constant 0 : index
    %c0_14 = arith.constant 0 : index
    %12 = vector.load %arg2[%c4, %c0_13, %c0_14] : memref<6x32x16xf32, #tpu.memory_space<vmem>>, vector<1x32x16xf32>
    %13 = vector.shape_cast %12 : vector<1x32x16xf32> to vector<32x16xf32>
    %cst_15 = arith.constant dense<0.000000e+00> : vector<16x16xf32>
    %14 = tpu.matmul %5, %13, %cst_15 {dimension_numbers = #tpu.dot_dimension_numbers<[1], [0], [0], [1], [0, 0, 1, 1], [], []>} : vector<16x32xf32>, vector<32x16xf32>, vector<16x16xf32> -> vector<16x16xf32>
    %15 = vector.extract_strided_slice %8 {offsets = [0, 0], sizes = [8, 16], strides = [1, 1]} : vector<16x16xf32> to vector<8x16xf32>
    %c0_16 = arith.constant 0 : index
    %c0_17 = arith.constant 0 : index
    %c0_18 = arith.constant 0 : index
    %16 = vector.load %arg6[%c0_16, %c0_17, %c0_18] : memref<4x8x16xf32, #tpu.memory_space<vmem>>, vector<1x8x16xf32>
    %17 = vector.shape_cast %16 : vector<1x8x16xf32> to vector<8x16xf32>
    %18 = vector.shape_cast %15 : vector<8x16xf32> to vector<1x8x16xf32>
    tpu.vector_store %arg6[%c0_16, %c0_17, %c0_18], %18 {strides = array<i32>} : memref<4x8x16xf32, #tpu.memory_space<vmem>>, vector<1x8x16xf32>,
    %19 = vector.extract_strided_slice %11 {offsets = [0, 0], sizes = [8, 16], strides = [1, 1]} : vector<16x16xf32> to vector<8x16xf32>
    %c0_19 = arith.constant 0 : index
    %c0_20 = arith.constant 0 : index
    %c0_21 = arith.constant 0 : index
    %20 = vector.load %arg7[%c0_19, %c0_20, %c0_21] : memref<4x8x16xf32, #tpu.memory_space<vmem>>, vector<1x8x16xf32>
    %21 = vector.shape_cast %20 : vector<1x8x16xf32> to vector<8x16xf32>
    %22 = vector.shape_cast %19 : vector<8x16xf32> to vector<1x8x16xf32>
    tpu.vector_store %arg7[%c0_19, %c0_20, %c0_21], %22 {strides = array<i32>} : memref<4x8x16xf32, #tpu.memory_space<vmem>>, vector<1x8x16xf32>,
    %23 = vector.extract_strided_slice %14 {offsets = [0, 0], sizes = [8, 16], strides = [1, 1]} : vector<16x16xf32> to vector<8x16xf32>
    %c0_22 = arith.constant 0 : index
    %c0_23 = arith.constant 0 : index
    %c0_24 = arith.constant 0 : index
    %24 = vector.load %arg8[%c0_22, %c0_23, %c0_24] : memref<4x8x16xf32, #tpu.memory_space<vmem>>, vector<1x8x16xf32>
    %25 = vector.shape_cast %24 : vector<1x8x16xf32> to vector<8x16xf32>
    %26 = vector.shape_cast %23 : vector<8x16xf32> to vector<1x8x16xf32>
    tpu.vector_store %arg8[%c0_22, %c0_23, %c0_24], %26 {strides = array<i32>} : memref<4x8x16xf32, #tpu.memory_space<vmem>>, vector<1x8x16xf32>,
    %27 = vector.extract_strided_slice %8 {offsets = [8, 0], sizes = [8, 16], strides = [1, 1]} : vector<16x16xf32> to vector<8x16xf32>
    %c1_25 = arith.constant 1 : index
    %c0_26 = arith.constant 0 : index
    %c0_27 = arith.constant 0 : index
    %28 = vector.load %arg6[%c1_25, %c0_26, %c0_27] : memref<4x8x16xf32, #tpu.memory_space<vmem>>, vector<1x8x16xf32>
    %29 = vector.shape_cast %28 : vector<1x8x16xf32> to vector<8x16xf32>
    %30 = vector.shape_cast %27 : vector<8x16xf32> to vector<1x8x16xf32>
    tpu.vector_store %arg6[%c1_25, %c0_26, %c0_27], %30 {strides = array<i32>} : memref<4x8x16xf32, #tpu.memory_space<vmem>>, vector<1x8x16xf32>,
    %31 = vector.extract_strided_slice %11 {offsets = [8, 0], sizes = [8, 16], strides = [1, 1]} : vector<16x16xf32> to vector<8x16xf32>
    %c1_28 = arith.constant 1 : index
    %c0_29 = arith.constant 0 : index
    %c0_30 = arith.constant 0 : index
    %32 = vector.load %arg7[%c1_28, %c0_29, %c0_30] : memref<4x8x16xf32, #tpu.memory_space<vmem>>, vector<1x8x16xf32>
    %33 = vector.shape_cast %32 : vector<1x8x16xf32> to vector<8x16xf32>
    %34 = vector.shape_cast %31 : vector<8x16xf32> to vector<1x8x16xf32>
    tpu.vector_store %arg7[%c1_28, %c0_29, %c0_30], %34 {strides = array<i32>} : memref<4x8x16xf32, #tpu.memory_space<vmem>>, vector<1x8x16xf32>,
    %35 = vector.extract_strided_slice %14 {offsets = [8, 0], sizes = [8, 16], strides = [1, 1]} : vector<16x16xf32> to vector<8x16xf32>
    %c1_31 = arith.constant 1 : index
    %c0_32 = arith.constant 0 : index
    %c0_33 = arith.constant 0 : index
    %36 = vector.load %arg8[%c1_31, %c0_32, %c0_33] : memref<4x8x16xf32, #tpu.memory_space<vmem>>, vector<1x8x16xf32>
    %37 = vector.shape_cast %36 : vector<1x8x16xf32> to vector<8x16xf32>
    %38 = vector.shape_cast %35 : vector<8x16xf32> to vector<1x8x16xf32>
    tpu.vector_store %arg8[%c1_31, %c0_32, %c0_33], %38 {strides = array<i32>} : memref<4x8x16xf32, #tpu.memory_space<vmem>>, vector<1x8x16xf32>,
    %c1_34 = arith.constant 1 : index
    %c0_35 = arith.constant 0 : index
    %c0_36 = arith.constant 0 : index
    %39 = vector.load %arg2[%c1_34, %c0_35, %c0_36] : memref<6x32x16xf32, #tpu.memory_space<vmem>>, vector<1x32x16xf32>
    %40 = vector.shape_cast %39 : vector<1x32x16xf32> to vector<32x16xf32>
    %cst_37 = arith.constant dense<0.000000e+00> : vector<16x16xf32>
    %41 = tpu.matmul %1, %40, %cst_37 {dimension_numbers = #tpu.dot_dimension_numbers<[1], [0], [0], [1], [0, 0, 1, 1], [], []>} : vector<16x32xf32>, vector<32x16xf32>, vector<16x16xf32> -> vector<16x16xf32>
    %c3 = arith.constant 3 : index
    %c0_38 = arith.constant 0 : index
    %c0_39 = arith.constant 0 : index
    %42 = vector.load %arg2[%c3, %c0_38, %c0_39] : memref<6x32x16xf32, #tpu.memory_space<vmem>>, vector<1x32x16xf32>
    %43 = vector.shape_cast %42 : vector<1x32x16xf32> to vector<32x16xf32>
    %cst_40 = arith.constant dense<0.000000e+00> : vector<16x16xf32>
    %44 = tpu.matmul %3, %43, %cst_40 {dimension_numbers = #tpu.dot_dimension_numbers<[1], [0], [0], [1], [0, 0, 1, 1], [], []>} : vector<16x32xf32>, vector<32x16xf32>, vector<16x16xf32> -> vector<16x16xf32>
    %c5 = arith.constant 5 : index
    %c0_41 = arith.constant 0 : index
    %c0_42 = arith.constant 0 : index
    %45 = vector.load %arg2[%c5, %c0_41, %c0_42] : memref<6x32x16xf32, #tpu.memory_space<vmem>>, vector<1x32x16xf32>
    %46 = vector.shape_cast %45 : vector<1x32x16xf32> to vector<32x16xf32>
    %cst_43 = arith.constant dense<0.000000e+00> : vector<16x16xf32>
    %47 = tpu.matmul %5, %46, %cst_43 {dimension_numbers = #tpu.dot_dimension_numbers<[1], [0], [0], [1], [0, 0, 1, 1], [], []>} : vector<16x32xf32>, vector<32x16xf32>, vector<16x16xf32> -> vector<16x16xf32>
    %48 = vector.extract_strided_slice %41 {offsets = [0, 0], sizes = [8, 16], strides = [1, 1]} : vector<16x16xf32> to vector<8x16xf32>
    %c2_44 = arith.constant 2 : index
    %c0_45 = arith.constant 0 : index
    %c0_46 = arith.constant 0 : index
    %49 = vector.load %arg6[%c2_44, %c0_45, %c0_46] : memref<4x8x16xf32, #tpu.memory_space<vmem>>, vector<1x8x16xf32>
    %50 = vector.shape_cast %49 : vector<1x8x16xf32> to vector<8x16xf32>
    %51 = vector.shape_cast %48 : vector<8x16xf32> to vector<1x8x16xf32>
    tpu.vector_store %arg6[%c2_44, %c0_45, %c0_46], %51 {strides = array<i32>} : memref<4x8x16xf32, #tpu.memory_space<vmem>>, vector<1x8x16xf32>,
    %52 = vector.extract_strided_slice %44 {offsets = [0, 0], sizes = [8, 16], strides = [1, 1]} : vector<16x16xf32> to vector<8x16xf32>
    %c2_47 = arith.constant 2 : index
    %c0_48 = arith.constant 0 : index
    %c0_49 = arith.constant 0 : index
    %53 = vector.load %arg7[%c2_47, %c0_48, %c0_49] : memref<4x8x16xf32, #tpu.memory_space<vmem>>, vector<1x8x16xf32>
    %54 = vector.shape_cast %53 : vector<1x8x16xf32> to vector<8x16xf32>
    %55 = vector.shape_cast %52 : vector<8x16xf32> to vector<1x8x16xf32>
    tpu.vector_store %arg7[%c2_47, %c0_48, %c0_49], %55 {strides = array<i32>} : memref<4x8x16xf32, #tpu.memory_space<vmem>>, vector<1x8x16xf32>,
    %56 = vector.extract_strided_slice %47 {offsets = [0, 0], sizes = [8, 16], strides = [1, 1]} : vector<16x16xf32> to vector<8x16xf32>
    %c2_50 = arith.constant 2 : index
    %c0_51 = arith.constant 0 : index
    %c0_52 = arith.constant 0 : index
    %57 = vector.load %arg8[%c2_50, %c0_51, %c0_52] : memref<4x8x16xf32, #tpu.memory_space<vmem>>, vector<1x8x16xf32>
    %58 = vector.shape_cast %57 : vector<1x8x16xf32> to vector<8x16xf32>
    %59 = vector.shape_cast %56 : vector<8x16xf32> to vector<1x8x16xf32>
    tpu.vector_store %arg8[%c2_50, %c0_51, %c0_52], %59 {strides = array<i32>} : memref<4x8x16xf32, #tpu.memory_space<vmem>>, vector<1x8x16xf32>,
    %60 = vector.extract_strided_slice %41 {offsets = [8, 0], sizes = [8, 16], strides = [1, 1]} : vector<16x16xf32> to vector<8x16xf32>
    %c3_53 = arith.constant 3 : index
    %c0_54 = arith.constant 0 : index
    %c0_55 = arith.constant 0 : index
    %61 = vector.load %arg6[%c3_53, %c0_54, %c0_55] : memref<4x8x16xf32, #tpu.memory_space<vmem>>, vector<1x8x16xf32>
    %62 = vector.shape_cast %61 : vector<1x8x16xf32> to vector<8x16xf32>
    %63 = vector.shape_cast %60 : vector<8x16xf32> to vector<1x8x16xf32>
    tpu.vector_store %arg6[%c3_53, %c0_54, %c0_55], %63 {strides = array<i32>} : memref<4x8x16xf32, #tpu.memory_space<vmem>>, vector<1x8x16xf32>,
    %64 = vector.extract_strided_slice %44 {offsets = [8, 0], sizes = [8, 16], strides = [1, 1]} : vector<16x16xf32> to vector<8x16xf32>
    %c3_56 = arith.constant 3 : index
    %c0_57 = arith.constant 0 : index
    %c0_58 = arith.constant 0 : index
    %65 = vector.load %arg7[%c3_56, %c0_57, %c0_58] : memref<4x8x16xf32, #tpu.memory_space<vmem>>, vector<1x8x16xf32>
    %66 = vector.shape_cast %65 : vector<1x8x16xf32> to vector<8x16xf32>
    %67 = vector.shape_cast %64 : vector<8x16xf32> to vector<1x8x16xf32>
    tpu.vector_store %arg7[%c3_56, %c0_57, %c0_58], %67 {strides = array<i32>} : memref<4x8x16xf32, #tpu.memory_space<vmem>>, vector<1x8x16xf32>,
    %68 = vector.extract_strided_slice %47 {offsets = [8, 0], sizes = [8, 16], strides = [1, 1]} : vector<16x16xf32> to vector<8x16xf32>
    %c3_59 = arith.constant 3 : index
    %c0_60 = arith.constant 0 : index
    %c0_61 = arith.constant 0 : index
    %69 = vector.load %arg8[%c3_59, %c0_60, %c0_61] : memref<4x8x16xf32, #tpu.memory_space<vmem>>, vector<1x8x16xf32>
    %70 = vector.shape_cast %69 : vector<1x8x16xf32> to vector<8x16xf32>
    %71 = vector.shape_cast %68 : vector<8x16xf32> to vector<1x8x16xf32>
    tpu.vector_store %arg8[%c3_59, %c0_60, %c0_61], %71 {strides = array<i32>} : memref<4x8x16xf32, #tpu.memory_space<vmem>>, vector<1x8x16xf32>,
    %c0_62 = arith.constant 0 : index
    %c0_63 = arith.constant 0 : index
    %c0_64 = arith.constant 0 : index
    %72 = vector.load %arg6[%c0_62, %c0_63, %c0_64] : memref<4x8x16xf32, #tpu.memory_space<vmem>>, vector<4x8x16xf32>
    %c0_65 = arith.constant 0 : index
    %c0_66 = arith.constant 0 : index
    %c0_67 = arith.constant 0 : index
    %73 = vector.load %arg7[%c0_65, %c0_66, %c0_67] : memref<4x8x16xf32, #tpu.memory_space<vmem>>, vector<4x8x16xf32>
    %c0_68 = arith.constant 0 : index
    %c0_69 = arith.constant 0 : index
    %c0_70 = arith.constant 0 : index
    %74 = vector.load %arg8[%c0_68, %c0_69, %c0_70] : memref<4x8x16xf32, #tpu.memory_space<vmem>>, vector<4x8x16xf32>
    "tpu.trace_start"() <{level = 10 : i32, message = "sqd,skd->sqk"}> : () -> ()
    %cst_71 = arith.constant dense<0.000000e+00> : vector<4x8x8xf32>
    %75 = tpu.matmul %72, %73, %cst_71 {dimension_numbers = #tpu.dot_dimension_numbers<[2], [2], [1], [1], [0, 0, 0, 1, 1, 1], [0], [0]>} : vector<4x8x16xf32>, vector<4x8x16xf32>, vector<4x8x8xf32> -> vector<4x8x8xf32>
    "tpu.trace_stop"() : () -> ()
    %cst_72 = arith.constant dense<0xFF800000> : vector<4x8xf32>
    %76 = vector.multi_reduction <maximumf>, %75, %cst_72 [2] : vector<4x8x8xf32> to vector<4x8xf32>
    %77 = vector.shape_cast %76 : vector<4x8xf32> to vector<4x8x1xf32>
    %78 = vector.broadcast %77 : vector<4x8x1xf32> to vector<4x8x8xf32>
    %79 = arith.subf %75, %78 : vector<4x8x8xf32>
    %80 = math.exp %79 : vector<4x8x8xf32>
    %cst_73 = arith.constant dense<0.000000e+00> : vector<4x8xf32>
    %81 = vector.multi_reduction <add>, %80, %cst_73 [2] : vector<4x8x8xf32> to vector<4x8xf32>
    %82 = vector.shape_cast %81 : vector<4x8xf32> to vector<4x8x1xf32>
    %83 = tpu.reciprocal %82 : vector<4x8x1xf32> -> vector<4x8x1xf32>
    %84 = vector.broadcast %83 : vector<4x8x1xf32> to vector<4x8x8xf32>
    %85 = arith.mulf %80, %84 : vector<4x8x8xf32>
    "tpu.trace_start"() <{level = 10 : i32, message = "sqk,skd->sqd"}> : () -> ()
    %cst_74 = arith.constant dense<0.000000e+00> : vector<4x8x16xf32>
    %86 = tpu.matmul %85, %74, %cst_74 {dimension_numbers = #tpu.dot_dimension_numbers<[2], [1], [1], [2], [0, 0, 0, 1, 1, 2], [0], [0]>} : vector<4x8x8xf32>, vector<4x8x16xf32>, vector<4x8x16xf32> -> vector<4x8x16xf32>
    "tpu.trace_stop"() : () -> ()
    %c0_75 = arith.constant 0 : index
    %c0_76 = arith.constant 0 : index
    %c0_77 = arith.constant 0 : index
    %87 = vector.load %arg4[%c0_75, %c0_76, %c0_77] : memref<3x1x32xf32, #tpu.memory_space<vmem>>, vector<1x1x32xf32>
    %88 = vector.shape_cast %87 : vector<1x1x32xf32> to vector<1x32xf32>
    %c1_78 = arith.constant 1 : index
    %c0_79 = arith.constant 0 : index
    %c0_80 = arith.constant 0 : index
    %89 = vector.load %arg4[%c1_78, %c0_79, %c0_80] : memref<3x1x32xf32, #tpu.memory_space<vmem>>, vector<1x1x32xf32>
    %90 = vector.shape_cast %89 : vector<1x1x32xf32> to vector<1x32xf32>
    %c2_81 = arith.constant 2 : index
    %c0_82 = arith.constant 0 : index
    %c0_83 = arith.constant 0 : index
    %91 = vector.load %arg4[%c2_81, %c0_82, %c0_83] : memref<3x1x32xf32, #tpu.memory_space<vmem>>, vector<1x1x32xf32>
    %92 = vector.shape_cast %91 : vector<1x1x32xf32> to vector<1x32xf32>
    %93 = vector.extract_strided_slice %1 {offsets = [0, 0], sizes = [8, 32], strides = [1, 1]} : vector<16x32xf32> to vector<8x32xf32>
    %94 = vector.broadcast %88 : vector<1x32xf32> to vector<8x32xf32>
    %95 = arith.addf %93, %94 : vector<8x32xf32>
    %96 = vector.extract_strided_slice %86 {offsets = [0, 0, 0], sizes = [1, 8, 16], strides = [1, 1, 1]} : vector<4x8x16xf32> to vector<1x8x16xf32>
    %97 = vector.shape_cast %96 : vector<1x8x16xf32> to vector<8x16xf32>
    %c0_84 = arith.constant 0 : index
    %c0_85 = arith.constant 0 : index
    %c0_86 = arith.constant 0 : index
    %98 = vector.load %arg3[%c0_84, %c0_85, %c0_86] : memref<2x16x32xf32, #tpu.memory_space<vmem>>, vector<1x16x32xf32>
    %99 = vector.shape_cast %98 : vector<1x16x32xf32> to vector<16x32xf32>
    %cst_87 = arith.constant dense<0.000000e+00> : vector<8x32xf32>
    %100 = tpu.matmul %97, %99, %cst_87 {dimension_numbers = #tpu.dot_dimension_numbers<[1], [0], [0], [1], [0, 0, 1, 1], [], []>} : vector<8x16xf32>, vector<16x32xf32>, vector<8x32xf32> -> vector<8x32xf32>
    %101 = arith.addf %95, %100 : vector<8x32xf32>
    %102 = vector.extract_strided_slice %86 {offsets = [2, 0, 0], sizes = [1, 8, 16], strides = [1, 1, 1]} : vector<4x8x16xf32> to vector<1x8x16xf32>
    %103 = vector.shape_cast %102 : vector<1x8x16xf32> to vector<8x16xf32>
    %c1_88 = arith.constant 1 : index
    %c0_89 = arith.constant 0 : index
    %c0_90 = arith.constant 0 : index
    %104 = vector.load %arg3[%c1_88, %c0_89, %c0_90] : memref<2x16x32xf32, #tpu.memory_space<vmem>>, vector<1x16x32xf32>
    %105 = vector.shape_cast %104 : vector<1x16x32xf32> to vector<16x32xf32>
    %cst_91 = arith.constant dense<0.000000e+00> : vector<8x32xf32>
    %106 = tpu.matmul %103, %105, %cst_91 {dimension_numbers = #tpu.dot_dimension_numbers<[1], [0], [0], [1], [0, 0, 1, 1], [], []>} : vector<8x16xf32>, vector<16x32xf32>, vector<8x32xf32> -> vector<8x32xf32>
    %107 = arith.addf %101, %106 : vector<8x32xf32>
    %cst_92 = arith.constant dense<0.000000e+00> : vector<8xf32>
    %108 = vector.multi_reduction <add>, %107, %cst_92 [1] : vector<8x32xf32> to vector<8xf32>
    %109 = vector.shape_cast %108 : vector<8xf32> to vector<8x1xf32>
    %110 = arith.mulf %107, %107 : vector<8x32xf32>
    %cst_93 = arith.constant dense<0.000000e+00> : vector<8xf32>
    %111 = vector.multi_reduction <add>, %110, %cst_93 [1] : vector<8x32xf32> to vector<8xf32>
    %112 = vector.shape_cast %111 : vector<8xf32> to vector<8x1xf32>
    %cst_94 = arith.constant 3.125000e-02 : f32
    %113 = vector.broadcast %cst_94 : f32 to vector<8x1xf32>
    %114 = arith.mulf %109, %113 : vector<8x1xf32>
    %cst_95 = arith.constant 3.125000e-02 : f32
    %115 = vector.broadcast %cst_95 : f32 to vector<8x1xf32>
    %116 = arith.mulf %112, %115 : vector<8x1xf32>
    %117 = arith.mulf %114, %114 : vector<8x1xf32>
    %118 = arith.subf %116, %117 : vector<8x1xf32>
    %119 = vector.broadcast %114 : vector<8x1xf32> to vector<8x32xf32>
    %120 = arith.subf %107, %119 : vector<8x32xf32>
    %cst_96 = arith.constant 9.99999974E-6 : f32
    %121 = vector.broadcast %cst_96 : f32 to vector<8x1xf32>
    %122 = arith.addf %118, %121 : vector<8x1xf32>
    %123 = math.rsqrt %122 : vector<8x1xf32>
    %124 = vector.broadcast %123 : vector<8x1xf32> to vector<8x32xf32>
    %125 = arith.mulf %120, %124 : vector<8x32xf32>
    %126 = vector.broadcast %90 : vector<1x32xf32> to vector<8x32xf32>
    %127 = arith.mulf %125, %126 : vector<8x32xf32>
    %128 = vector.broadcast %92 : vector<1x32xf32> to vector<8x32xf32>
    %129 = arith.addf %127, %128 : vector<8x32xf32>
    %c0_97 = arith.constant 0 : index
    %c0_98 = arith.constant 0 : index
    %130 = vector.load %arg5[%c0_97, %c0_98] : memref<16x32xf32, #tpu.memory_space<vmem>>, vector<8x32xf32>
    tpu.vector_store %arg5[%c0_97, %c0_98], %129 {strides = array<i32>} : memref<16x32xf32, #tpu.memory_space<vmem>>, vector<8x32xf32>,
    %131 = vector.extract_strided_slice %1 {offsets = [8, 0], sizes = [8, 32], strides = [1, 1]} : vector<16x32xf32> to vector<8x32xf32>
    %132 = vector.broadcast %88 : vector<1x32xf32> to vector<8x32xf32>
    %133 = arith.addf %131, %132 : vector<8x32xf32>
    %134 = vector.extract_strided_slice %86 {offsets = [1, 0, 0], sizes = [1, 8, 16], strides = [1, 1, 1]} : vector<4x8x16xf32> to vector<1x8x16xf32>
    %135 = vector.shape_cast %134 : vector<1x8x16xf32> to vector<8x16xf32>
    %c0_99 = arith.constant 0 : index
    %c0_100 = arith.constant 0 : index
    %c0_101 = arith.constant 0 : index
    %136 = vector.load %arg3[%c0_99, %c0_100, %c0_101] : memref<2x16x32xf32, #tpu.memory_space<vmem>>, vector<1x16x32xf32>
    %137 = vector.shape_cast %136 : vector<1x16x32xf32> to vector<16x32xf32>
    %cst_102 = arith.constant dense<0.000000e+00> : vector<8x32xf32>
    %138 = tpu.matmul %135, %137, %cst_102 {dimension_numbers = #tpu.dot_dimension_numbers<[1], [0], [0], [1], [0, 0, 1, 1], [], []>} : vector<8x16xf32>, vector<16x32xf32>, vector<8x32xf32> -> vector<8x32xf32>
    %139 = arith.addf %133, %138 : vector<8x32xf32>
    %140 = vector.extract_strided_slice %86 {offsets = [3, 0, 0], sizes = [1, 8, 16], strides = [1, 1, 1]} : vector<4x8x16xf32> to vector<1x8x16xf32>
    %141 = vector.shape_cast %140 : vector<1x8x16xf32> to vector<8x16xf32>
    %c1_103 = arith.constant 1 : index
    %c0_104 = arith.constant 0 : index
    %c0_105 = arith.constant 0 : index
    %142 = vector.load %arg3[%c1_103, %c0_104, %c0_105] : memref<2x16x32xf32, #tpu.memory_space<vmem>>, vector<1x16x32xf32>
    %143 = vector.shape_cast %142 : vector<1x16x32xf32> to vector<16x32xf32>
    %cst_106 = arith.constant dense<0.000000e+00> : vector<8x32xf32>
    %144 = tpu.matmul %141, %143, %cst_106 {dimension_numbers = #tpu.dot_dimension_numbers<[1], [0], [0], [1], [0, 0, 1, 1], [], []>} : vector<8x16xf32>, vector<16x32xf32>, vector<8x32xf32> -> vector<8x32xf32>
    %145 = arith.addf %139, %144 : vector<8x32xf32>
    %cst_107 = arith.constant dense<0.000000e+00> : vector<8xf32>
    %146 = vector.multi_reduction <add>, %145, %cst_107 [1] : vector<8x32xf32> to vector<8xf32>
    %147 = vector.shape_cast %146 : vector<8xf32> to vector<8x1xf32>
    %148 = arith.mulf %145, %145 : vector<8x32xf32>
    %cst_108 = arith.constant dense<0.000000e+00> : vector<8xf32>
    %149 = vector.multi_reduction <add>, %148, %cst_108 [1] : vector<8x32xf32> to vector<8xf32>
    %150 = vector.shape_cast %149 : vector<8xf32> to vector<8x1xf32>
    %cst_109 = arith.constant 3.125000e-02 : f32
    %151 = vector.broadcast %cst_109 : f32 to vector<8x1xf32>
    %152 = arith.mulf %147, %151 : vector<8x1xf32>
    %cst_110 = arith.constant 3.125000e-02 : f32
    %153 = vector.broadcast %cst_110 : f32 to vector<8x1xf32>
    %154 = arith.mulf %150, %153 : vector<8x1xf32>
    %155 = arith.mulf %152, %152 : vector<8x1xf32>
    %156 = arith.subf %154, %155 : vector<8x1xf32>
    %157 = vector.broadcast %152 : vector<8x1xf32> to vector<8x32xf32>
    %158 = arith.subf %145, %157 : vector<8x32xf32>
    %cst_111 = arith.constant 9.99999974E-6 : f32
    %159 = vector.broadcast %cst_111 : f32 to vector<8x1xf32>
    %160 = arith.addf %156, %159 : vector<8x1xf32>
    %161 = math.rsqrt %160 : vector<8x1xf32>
    %162 = vector.broadcast %161 : vector<8x1xf32> to vector<8x32xf32>
    %163 = arith.mulf %158, %162 : vector<8x32xf32>
    %164 = vector.broadcast %90 : vector<1x32xf32> to vector<8x32xf32>
    %165 = arith.mulf %163, %164 : vector<8x32xf32>
    %166 = vector.broadcast %92 : vector<1x32xf32> to vector<8x32xf32>
    %167 = arith.addf %165, %166 : vector<8x32xf32>
    %c8 = arith.constant 8 : index
    %c0_112 = arith.constant 0 : index
    %168 = vector.load %arg5[%c8, %c0_112] : memref<16x32xf32, #tpu.memory_space<vmem>>, vector<8x32xf32>
    tpu.vector_store %arg5[%c8, %c0_112], %167 {strides = array<i32>} : memref<16x32xf32, #tpu.memory_space<vmem>>, vector<8x32xf32>,
    return
  }
  func.func @transform_0(%arg0: i32) -> (i32, i32, i32) {
    %c0_i32 = arith.constant 0 : i32
    %c0_i32_0 = arith.constant 0 : i32
    %c0_i32_1 = arith.constant 0 : i32
    %c0_i32_2 = arith.constant 0 : i32
    return %c0_i32, %c0_i32_0, %c0_i32_1 : i32, i32, i32
  }
  func.func @transform_1(%arg0: i32) -> (i32, i32, i32) {
    %c0_i32 = arith.constant 0 : i32
    %c0_i32_0 = arith.constant 0 : i32
    %c0_i32_1 = arith.constant 0 : i32
    %c0_i32_2 = arith.constant 0 : i32
    return %c0_i32, %c0_i32_0, %c0_i32_1 : i32, i32, i32
  }
  func.func @transform_2(%arg0: i32) -> (i32, i32, i32) {
    %c0_i32 = arith.constant 0 : i32
    %c0_i32_0 = arith.constant 0 : i32
    %c0_i32_1 = arith.constant 0 : i32
    %c0_i32_2 = arith.constant 0 : i32
    return %c0_i32, %c0_i32_0, %c0_i32_1 : i32, i32, i32
  }
  func.func @transform_3(%arg0: i32) -> (i32, i32, i32) {
    %c0_i32 = arith.constant 0 : i32
    %c0_i32_0 = arith.constant 0 : i32
    %c0_i32_1 = arith.constant 0 : i32
    %c0_i32_2 = arith.constant 0 : i32
    return %c0_i32, %c0_i32_0, %c0_i32_1 : i32, i32, i32
  }
  func.func @transform_4(%arg0: i32) -> (i32, i32) {
    %c0_i32 = arith.constant 0 : i32
    %c0_i32_0 = arith.constant 0 : i32
    %c0_i32_1 = arith.constant 0 : i32
    return %c0_i32, %c0_i32_0 : i32, i32
  }
}

</mosaic_0001>

<llo_original>
// kernel: multi_head_attention.1
$region0: #{multi_head_attention.1}
  #allocation0 [shape = 'u32[]', space=smem, size = 0x4, offset = 0x4, fixed_abs, tag = 'smem constant byte address 0x4 - core index']
  #allocation1 [shape = 'u32[144,128]{1,0:T(1,128)}', space=vmem, size = 0x12000, scoped, tag = 'internal scratch']
  #allocation2 [shape = 'f32[4,8,16]{2,1,0:T(8,128)}', space=vmem, size = 0x4000, scoped, tag = 'scratch operand']
  #allocation3 [shape = 'f32[4,8,16]{2,1,0:T(8,128)}', space=vmem, size = 0x4000, scoped, tag = 'scratch operand']
  #allocation4 [shape = 'f32[4,8,16]{2,1,0:T(8,128)}', space=vmem, size = 0x4000, scoped, tag = 'scratch operand']
  %s0 = inlined_call_operand.vmem [shape: f32[3,16,32], index: 0, kind: input, shape index: {}]
  %s1 = inlined_call_operand.vmem [shape: f32[6,32,16], index: 1, kind: input, shape index: {}]
  %s2 = inlined_call_operand.vmem [shape: f32[2,16,32], index: 2, kind: input, shape index: {}]
  %s3 = inlined_call_operand.vmem [shape: f32[3,1,32], index: 3, kind: input, shape index: {}]
  %s4 = inlined_call_operand.hbm [shape: f32[16,32], index: 4, kind: output, shape index: {}]
  %s5 = sld [smem:[#allocation0]]
  $region26: #{multi_head_attention.1} parent=0
    _
  %s7 = ssub.s32 1, %s5
  %s8 = scalar_select 0, %s7, %s5
  $region1: #{multi_head_attention.1} parent=0
    #allocation5 [shape = 'u8[8192]{0}', space=vmem, size = 0x2000, scoped, tag = 'output window, operand 0, single buffered']
    #allocation6 [shape = 's32[1]{0}', space=sflag, size = 0x4, scoped, tag = 'scoped memory for multi_head_attention.1']
    %9 = vsyncpa [#allocation6], 0
    // Predicated region
    $region2: #{multi_head_attention.1} parent=1 // pred_check
      _
    $region3: #{multi_head_attention.1} parent=1 // pred_check_branch
      %11 = sbr.rel (0) target = $region5
    $region4: #{multi_head_attention.1} parent=1 // pred_region
      _
    $region5: #{multi_head_attention.1} parent=1 // pred_fallthru
      _
    // Predicated region
    $region6: #{multi_head_attention.1} parent=1 // pred_check
      _
    $region7: #{multi_head_attention.1} parent=1 // pred_check_branch
      %13 = sbr.rel (0) target = $region9
    $region8: #{multi_head_attention.1} parent=1 // pred_region
      _
    $region9: #{multi_head_attention.1} parent=1 // pred_fallthru
      _
    // Predicated region
    $region10: #{multi_head_attention.1} parent=1 // pred_check
      _
    $region11: #{multi_head_attention.1} parent=1 // pred_check_branch
      %15 = sbr.rel (0) target = $region13
    $region12: #{multi_head_attention.1} parent=1 // pred_region
      _
    $region13: #{multi_head_attention.1} parent=1 // pred_fallthru
      _
    // Predicated region
    $region14: #{multi_head_attention.1} parent=1 // pred_check
      _
    $region15: #{multi_head_attention.1} parent=1 // pred_check_branch
      %17 = sbr.rel (0) target = $region17
    $region16: #{multi_head_attention.1} parent=1 // pred_region
      _
    $region17: #{multi_head_attention.1} parent=1 // pred_fallthru
      _
    %v18 = vld [vmem:[%s0] sm:$0xff]
    %v19 = vld [vmem:[%s0 + $0x8] sm:$0xff]
    %s20 = scalar_lea.vmem %s0, 16
    %v21 = vld [vmem:[%s20] sm:$0xff]
    %v22 = vld [vmem:[%s20 + $0x8] sm:$0xff]
    %s23 = scalar_lea.vmem %s0, 32
    %v24 = vld [vmem:[%s23] sm:$0xff]
    %v25 = vld [vmem:[%s23 + $0x8] sm:$0xff]
    %v26 = vld [vmem:[%s1] sm:$0xff]
    %v27 = vld [vmem:[%s1 + $0x8] sm:$0xff]
    %v28 = vld [vmem:[%s1 + $0x10] sm:$0xff]
    %v29 = vld [vmem:[%s1 + $0x18] sm:$0xff]
    %vm30 = vcmask 261120
    %v32 = vsel %vm30, %v18, 0
    %v35 = vsel %vm30, %v19, 0
    %37 = vmatprep.subr.mxu0 0.0
    %38 = vmatpush1.msra.mxu0 %v26
    %39 = vmatprep.subr.mxu0 0.0
    %40 = vmatpush1.msra.mxu0 %v27
    %41 = vmatprep.subr.mxu0 0.0
    %42 = vmatpush1.msra.mxu0 %v28
    %43 = vmatprep.subr.mxu0 0.0
    %44 = vmatpush1.msra.mxu0 %v29
    %45 = vmatprep.subr.mxu0 0.0
    %46 = vmatpush1.msra.mxu0 0.0
    %47 = vmatprep.subr.mxu0 0.0
    %48 = vmatpush1.msra.mxu0 0.0
    %49 = vmatprep.subr.mxu0 0.0
    %50 = vmatpush1.msra.mxu0 0.0
    %51 = vmatprep.subr.mxu0 0.0
    %52 = vmatpush1.msra.mxu0 0.0
    %53 = vmatprep.subr.mxu0 0.0
    %54 = vmatpush1.msra.mxu0 0.0
    %55 = vmatprep.subr.mxu0 0.0
    %56 = vmatpush1.msra.mxu0 0.0
    %57 = vmatprep.subr.mxu0 0.0
    %58 = vmatpush1.msra.mxu0 0.0
    %59 = vmatprep.subr.mxu0 0.0
    %60 = vmatpush1.msra.mxu0 0.0
    %61 = vmatprep.subr.mxu0 0.0
    %62 = vmatpush1.msra.mxu0 0.0
    %63 = vmatprep.subr.mxu0 0.0
    %64 = vmatpush1.msra.mxu0 0.0
    %65 = vmatprep.subr.mxu0 0.0
    %66 = vmatpush1.msra.mxu0 0.0
    %67 = vmatprep.subr.mxu0 0.0
    %68 = vmatpush1.msra.mxu0 0.0
    %69 = vmatprep.subr.mxu0 0.0
    %70 = vmatpush1.msra.mxu0 0.0
    %71 = vmatprep.subr.mxu0 0.0
    %72 = vmatpush1.msra.mxu0 0.0
    %73 = vmatprep.subr.mxu0 0.0
    %74 = vmatpush1.msra.mxu0 0.0
    %75 = vmatprep.subr.mxu0 0.0
    %76 = vmatpush1.msra.mxu0 0.0
    %77 = vmatprep.subr.mxu0 0.0
    %78 = vmatpush1.msra.mxu0 0.0
    %79 = vmatprep.subr.mxu0 0.0
    %80 = vmatpush1.msra.mxu0 0.0
    %81 = vmatprep.subr.mxu0 0.0
    %82 = vmatpush1.msra.mxu0 0.0
    %83 = vmatprep.subr.mxu0 0.0
    %84 = vmatpush1.msra.mxu0 0.0
    %85 = vmatprep.subr.mxu0 0.0
    %86 = vmatpush1.msra.mxu0 0.0
    %87 = vmatprep.subr.mxu0 0.0
    %88 = vmatpush1.msra.mxu0 0.0
    %89 = vmatprep.subr.mxu0 0.0
    %90 = vmatpush1.msra.mxu0 0.0
    %91 = vmatprep.subr.mxu0 0.0
    %92 = vmatpush1.msra.mxu0 0.0
    %93 = vmatprep.subr.mxu0 0.0
    %94 = vmatpush1.msra.mxu0 0.0
    %95 = vmatprep.subr.mxu0 0.0
    %96 = vmatpush1.msra.mxu0 0.0
    %97 = vmatprep.subr.mxu0 0.0
    %98 = vmatpush1.msra.mxu0 0.0
    %99 = vmatprep.subr.mxu0 0.0
    %100 = vmatpush1.msra.mxu0 0.0
    %101 = vmatprep.mubr.f32.mxu0 0.0
    %102 = vmatmul.mubr.f32.gmra.mrb[0].mxu0 %v32
    %v103 = vpop.f32.mrb[0].mxu0
    %v104 = vadd.f32 0.0, %v103
    %v105 = vpop.f32.mrb[0].mxu0
    %106 = vmatprep.mubr.f32.mxu0 0.0
    %107 = vmatmul.mubr.f32.gmra.mrb[0].mxu0 %v35
    %v108 = vpop.f32.mrb[0].mxu0
    %v109 = vadd.f32 0.0, %v108
    %v110 = vpop.f32.mrb[0].mxu0
    %111 = vdwg.mxu0
    %s112 = scalar_lea.vmem %s1, 64
    %v113 = vld [vmem:[%s112] sm:$0xff]
    %v114 = vld [vmem:[%s112 + $0x8] sm:$0xff]
    %v115 = vld [vmem:[%s112 + $0x10] sm:$0xff]
    %v116 = vld [vmem:[%s112 + $0x18] sm:$0xff]
    %v118 = vsel %vm30, %v21, 0
    %v121 = vsel %vm30, %v22, 0
    %123 = vmatprep.subr.mxu0 0.0
    %124 = vmatpush1.msra.mxu0 %v113
    %125 = vmatprep.subr.mxu0 0.0
    %126 = vmatpush1.msra.mxu0 %v114
    %127 = vmatprep.subr.mxu0 0.0
    %128 = vmatpush1.msra.mxu0 %v115
    %129 = vmatprep.subr.mxu0 0.0
    %130 = vmatpush1.msra.mxu0 %v116
    %131 = vmatprep.subr.mxu0 0.0
    %132 = vmatpush1.msra.mxu0 0.0
    %133 = vmatprep.subr.mxu0 0.0
    %134 = vmatpush1.msra.mxu0 0.0
    %135 = vmatprep.subr.mxu0 0.0
    %136 = vmatpush1.msra.mxu0 0.0
    %137 = vmatprep.subr.mxu0 0.0
    %138 = vmatpush1.msra.mxu0 0.0
    %139 = vmatprep.subr.mxu0 0.0
    %140 = vmatpush1.msra.mxu0 0.0
    %141 = vmatprep.subr.mxu0 0.0
    %142 = vmatpush1.msra.mxu0 0.0
    %143 = vmatprep.subr.mxu0 0.0
    %144 = vmatpush1.msra.mxu0 0.0
    %145 = vmatprep.subr.mxu0 0.0
    %146 = vmatpush1.msra.mxu0 0.0
    %147 = vmatprep.subr.mxu0 0.0
    %148 = vmatpush1.msra.mxu0 0.0
    %149 = vmatprep.subr.mxu0 0.0
    %150 = vmatpush1.msra.mxu0 0.0
    %151 = vmatprep.subr.mxu0 0.0
    %152 = vmatpush1.msra.mxu0 0.0
    %153 = vmatprep.subr.mxu0 0.0
    %154 = vmatpush1.msra.mxu0 0.0
    %155 = vmatprep.subr.mxu0 0.0
    %156 = vmatpush1.msra.mxu0 0.0
    %157 = vmatprep.subr.mxu0 0.0
    %158 = vmatpush1.msra.mxu0 0.0
    %159 = vmatprep.subr.mxu0 0.0
    %160 = vmatpush1.msra.mxu0 0.0
    %161 = vmatprep.subr.mxu0 0.0
    %162 = vmatpush1.msra.mxu0 0.0
    %163 = vmatprep.subr.mxu0 0.0
    %164 = vmatpush1.msra.mxu0 0.0
    %165 = vmatprep.subr.mxu0 0.0
    %166 = vmatpush1.msra.mxu0 0.0
    %167 = vmatprep.subr.mxu0 0.0
    %168 = vmatpush1.msra.mxu0 0.0
    %169 = vmatprep.subr.mxu0 0.0
    %170 = vmatpush1.msra.mxu0 0.0
    %171 = vmatprep.subr.mxu0 0.0
    %172 = vmatpush1.msra.mxu0 0.0
    %173 = vmatprep.subr.mxu0 0.0
    %174 = vmatpush1.msra.mxu0 0.0
    %175 = vmatprep.subr.mxu0 0.0
    %176 = vmatpush1.msra.mxu0 0.0
    %177 = vmatprep.subr.mxu0 0.0
    %178 = vmatpush1.msra.mxu0 0.0
    %179 = vmatprep.subr.mxu0 0.0
    %180 = vmatpush1.msra.mxu0 0.0
    %181 = vmatprep.subr.mxu0 0.0
    %182 = vmatpush1.msra.mxu0 0.0
    %183 = vmatprep.subr.mxu0 0.0
    %184 = vmatpush1.msra.mxu0 0.0
    %185 = vmatprep.subr.mxu0 0.0
    %186 = vmatpush1.msra.mxu0 0.0
    %187 = vmatprep.mubr.f32.mxu0 0.0
    %188 = vmatmul.mubr.f32.gmra.mrb[0].mxu0 %v118
    %v189 = vpop.f32.mrb[0].mxu0
    %v190 = vadd.f32 0.0, %v189
    %v191 = vpop.f32.mrb[0].mxu0
    %192 = vmatprep.mubr.f32.mxu0 0.0
    %193 = vmatmul.mubr.f32.gmra.mrb[0].mxu0 %v121
    %v194 = vpop.f32.mrb[0].mxu0
    %v195 = vadd.f32 0.0, %v194
    %v196 = vpop.f32.mrb[0].mxu0
    %197 = vdwg.mxu0
    %s198 = scalar_lea.vmem %s1, 128
    %v199 = vld [vmem:[%s198] sm:$0xff]
    %v200 = vld [vmem:[%s198 + $0x8] sm:$0xff]
    %v201 = vld [vmem:[%s198 + $0x10] sm:$0xff]
    %v202 = vld [vmem:[%s198 + $0x18] sm:$0xff]
    %v204 = vsel %vm30, %v24, 0
    %v207 = vsel %vm30, %v25, 0
    %209 = vmatprep.subr.mxu0 0.0
    %210 = vmatpush1.msra.mxu0 %v199
    %211 = vmatprep.subr.mxu0 0.0
    %212 = vmatpush1.msra.mxu0 %v200
    %213 = vmatprep.subr.mxu0 0.0
    %214 = vmatpush1.msra.mxu0 %v201
    %215 = vmatprep.subr.mxu0 0.0
    %216 = vmatpush1.msra.mxu0 %v202
    %217 = vmatprep.subr.mxu0 0.0
    %218 = vmatpush1.msra.mxu0 0.0
    %219 = vmatprep.subr.mxu0 0.0
    %220 = vmatpush1.msra.mxu0 0.0
    %221 = vmatprep.subr.mxu0 0.0
    %222 = vmatpush1.msra.mxu0 0.0
    %223 = vmatprep.subr.mxu0 0.0
    %224 = vmatpush1.msra.mxu0 0.0
    %225 = vmatprep.subr.mxu0 0.0
    %226 = vmatpush1.msra.mxu0 0.0
    %227 = vmatprep.subr.mxu0 0.0
    %228 = vmatpush1.msra.mxu0 0.0
    %229 = vmatprep.subr.mxu0 0.0
    %230 = vmatpush1.msra.mxu0 0.0
    %231 = vmatprep.subr.mxu0 0.0
    %232 = vmatpush1.msra.mxu0 0.0
    %233 = vmatprep.subr.mxu0 0.0
    %234 = vmatpush1.msra.mxu0 0.0
    %235 = vmatprep.subr.mxu0 0.0
    %236 = vmatpush1.msra.mxu0 0.0
    %237 = vmatprep.subr.mxu0 0.0
    %238 = vmatpush1.msra.mxu0 0.0
    %239 = vmatprep.subr.mxu0 0.0
    %240 = vmatpush1.msra.mxu0 0.0
    %241 = vmatprep.subr.mxu0 0.0
    %242 = vmatpush1.msra.mxu0 0.0
    %243 = vmatprep.subr.mxu0 0.0
    %244 = vmatpush1.msra.mxu0 0.0
    %245 = vmatprep.subr.mxu0 0.0
    %246 = vmatpush1.msra.mxu0 0.0
    %247 = vmatprep.subr.mxu0 0.0
    %248 = vmatpush1.msra.mxu0 0.0
    %249 = vmatprep.subr.mxu0 0.0
    %250 = vmatpush1.msra.mxu0 0.0
    %251 = vmatprep.subr.mxu0 0.0
    %252 = vmatpush1.msra.mxu0 0.0
    %253 = vmatprep.subr.mxu0 0.0
    %254 = vmatpush1.msra.mxu0 0.0
    %255 = vmatprep.subr.mxu0 0.0
    %256 = vmatpush1.msra.mxu0 0.0
    %257 = vmatprep.subr.mxu0 0.0
    %258 = vmatpush1.msra.mxu0 0.0
    %259 = vmatprep.subr.mxu0 0.0
    %260 = vmatpush1.msra.mxu0 0.0
    %261 = vmatprep.subr.mxu0 0.0
    %262 = vmatpush1.msra.mxu0 0.0
    %263 = vmatprep.subr.mxu0 0.0
    %264 = vmatpush1.msra.mxu0 0.0
    %265 = vmatprep.subr.mxu0 0.0
    %266 = vmatpush1.msra.mxu0 0.0
    %267 = vmatprep.subr.mxu0 0.0
    %268 = vmatpush1.msra.mxu0 0.0
    %269 = vmatprep.subr.mxu0 0.0
    %270 = vmatpush1.msra.mxu0 0.0
    %271 = vmatprep.subr.mxu0 0.0
    %272 = vmatpush1.msra.mxu0 0.0
    %273 = vmatprep.mubr.f32.mxu0 0.0
    %274 = vmatmul.mubr.f32.gmra.mrb[0].mxu0 %v204
    %v275 = vpop.f32.mrb[0].mxu0
    %v276 = vadd.f32 0.0, %v275
    %v277 = vpop.f32.mrb[0].mxu0
    %278 = vmatprep.mubr.f32.mxu0 0.0
    %279 = vmatmul.mubr.f32.gmra.mrb[0].mxu0 %v207
    %v280 = vpop.f32.mrb[0].mxu0
    %v281 = vadd.f32 0.0, %v280
    %v282 = vpop.f32.mrb[0].mxu0
    %283 = vdwg.mxu0
    %vm284 = vcmask 130048
    %285 = vst.msk [vmem:[#allocation2] sm:$0xff] %vm284, %v104
    %286 = vst.msk [vmem:[#allocation3] sm:$0xff] %vm284, %v190
    %287 = vst.msk [vmem:[#allocation4] sm:$0xff] %vm284, %v276
    %s288 = scalar_lea.vmem [#allocation2], 8
    %289 = vst.msk [vmem:[%s288] sm:$0xff] %vm284, %v109
    %s290 = scalar_lea.vmem [#allocation3], 8
    %291 = vst.msk [vmem:[%s290] sm:$0xff] %vm284, %v195
    %s292 = scalar_lea.vmem [#allocation4], 8
    %293 = vst.msk [vmem:[%s292] sm:$0xff] %vm284, %v281
    %s294 = scalar_lea.vmem %s1, 32
    %v295 = vld [vmem:[%s294] sm:$0xff]
    %v296 = vld [vmem:[%s294 + $0x8] sm:$0xff]
    %v297 = vld [vmem:[%s294 + $0x10] sm:$0xff]
    %v298 = vld [vmem:[%s294 + $0x18] sm:$0xff]
    %299 = vmatprep.subr.mxu0 0.0
    %300 = vmatpush1.msra.mxu0 %v295
    %301 = vmatprep.subr.mxu0 0.0
    %302 = vmatpush1.msra.mxu0 %v296
    %303 = vmatprep.subr.mxu0 0.0
    %304 = vmatpush1.msra.mxu0 %v297
    %305 = vmatprep.subr.mxu0 0.0
    %306 = vmatpush1.msra.mxu0 %v298
    %307 = vmatprep.subr.mxu0 0.0
    %308 = vmatpush1.msra.mxu0 0.0
    %309 = vmatprep.subr.mxu0 0.0
    %310 = vmatpush1.msra.mxu0 0.0
    %311 = vmatprep.subr.mxu0 0.0
    %312 = vmatpush1.msra.mxu0 0.0
    %313 = vmatprep.subr.mxu0 0.0
    %314 = vmatpush1.msra.mxu0 0.0
    %315 = vmatprep.subr.mxu0 0.0
    %316 = vmatpush1.msra.mxu0 0.0
    %317 = vmatprep.subr.mxu0 0.0
    %318 = vmatpush1.msra.mxu0 0.0
    %319 = vmatprep.subr.mxu0 0.0
    %320 = vmatpush1.msra.mxu0 0.0
    %321 = vmatprep.subr.mxu0 0.0
    %322 = vmatpush1.msra.mxu0 0.0
    %323 = vmatprep.subr.mxu0 0.0
    %324 = vmatpush1.msra.mxu0 0.0
    %325 = vmatprep.subr.mxu0 0.0
    %326 = vmatpush1.msra.mxu0 0.0
    %327 = vmatprep.subr.mxu0 0.0
    %328 = vmatpush1.msra.mxu0 0.0
    %329 = vmatprep.subr.mxu0 0.0
    %330 = vmatpush1.msra.mxu0 0.0
    %331 = vmatprep.subr.mxu0 0.0
    %332 = vmatpush1.msra.mxu0 0.0
    %333 = vmatprep.subr.mxu0 0.0
    %334 = vmatpush1.msra.mxu0 0.0
    %335 = vmatprep.subr.mxu0 0.0
    %336 = vmatpush1.msra.mxu0 0.0
    %337 = vmatprep.subr.mxu0 0.0
    %338 = vmatpush1.msra.mxu0 0.0
    %339 = vmatprep.subr.mxu0 0.0
    %340 = vmatpush1.msra.mxu0 0.0
    %341 = vmatprep.subr.mxu0 0.0
    %342 = vmatpush1.msra.mxu0 0.0
    %343 = vmatprep.subr.mxu0 0.0
    %344 = vmatpush1.msra.mxu0 0.0
    %345 = vmatprep.subr.mxu0 0.0
    %346 = vmatpush1.msra.mxu0 0.0
    %347 = vmatprep.subr.mxu0 0.0
    %348 = vmatpush1.msra.mxu0 0.0
    %349 = vmatprep.subr.mxu0 0.0
    %350 = vmatpush1.msra.mxu0 0.0
    %351 = vmatprep.subr.mxu0 0.0
    %352 = vmatpush1.msra.mxu0 0.0
    %353 = vmatprep.subr.mxu0 0.0
    %354 = vmatpush1.msra.mxu0 0.0
    %355 = vmatprep.subr.mxu0 0.0
    %356 = vmatpush1.msra.mxu0 0.0
    %357 = vmatprep.subr.mxu0 0.0
    %358 = vmatpush1.msra.mxu0 0.0
    %359 = vmatprep.subr.mxu0 0.0
    %360 = vmatpush1.msra.mxu0 0.0
    %361 = vmatprep.subr.mxu0 0.0
    %362 = vmatpush1.msra.mxu0 0.0
    %363 = vmatprep.mubr.f32.mxu0 0.0
    %364 = vmatmul.mubr.f32.gmra.mrb[0].mxu0 %v32
    %v365 = vpop.f32.mrb[0].mxu0
    %v366 = vadd.f32 0.0, %v365
    %v367 = vpop.f32.mrb[0].mxu0
    %368 = vmatprep.mubr.f32.mxu0 0.0
    %369 = vmatmul.mubr.f32.gmra.mrb[0].mxu0 %v35
    %v370 = vpop.f32.mrb[0].mxu0
    %v371 = vadd.f32 0.0, %v370
    %v372 = vpop.f32.mrb[0].mxu0
    %373 = vdwg.mxu0
    %s374 = scalar_lea.vmem %s1, 96
    %v375 = vld [vmem:[%s374] sm:$0xff]
    %v376 = vld [vmem:[%s374 + $0x8] sm:$0xff]
    %v377 = vld [vmem:[%s374 + $0x10] sm:$0xff]
    %v378 = vld [vmem:[%s374 + $0x18] sm:$0xff]
    %379 = vmatprep.subr.mxu0 0.0
    %380 = vmatpush1.msra.mxu0 %v375
    %381 = vmatprep.subr.mxu0 0.0
    %382 = vmatpush1.msra.mxu0 %v376
    %383 = vmatprep.subr.mxu0 0.0
    %384 = vmatpush1.msra.mxu0 %v377
    %385 = vmatprep.subr.mxu0 0.0
    %386 = vmatpush1.msra.mxu0 %v378
    %387 = vmatprep.subr.mxu0 0.0
    %388 = vmatpush1.msra.mxu0 0.0
    %389 = vmatprep.subr.mxu0 0.0
    %390 = vmatpush1.msra.mxu0 0.0
    %391 = vmatprep.subr.mxu0 0.0
    %392 = vmatpush1.msra.mxu0 0.0
    %393 = vmatprep.subr.mxu0 0.0
    %394 = vmatpush1.msra.mxu0 0.0
    %395 = vmatprep.subr.mxu0 0.0
    %396 = vmatpush1.msra.mxu0 0.0
    %397 = vmatprep.subr.mxu0 0.0
    %398 = vmatpush1.msra.mxu0 0.0
    %399 = vmatprep.subr.mxu0 0.0
    %400 = vmatpush1.msra.mxu0 0.0
    %401 = vmatprep.subr.mxu0 0.0
    %402 = vmatpush1.msra.mxu0 0.0
    %403 = vmatprep.subr.mxu0 0.0
    %404 = vmatpush1.msra.mxu0 0.0
    %405 = vmatprep.subr.mxu0 0.0
    %406 = vmatpush1.msra.mxu0 0.0
    %407 = vmatprep.subr.mxu0 0.0
    %408 = vmatpush1.msra.mxu0 0.0
    %409 = vmatprep.subr.mxu0 0.0
    %410 = vmatpush1.msra.mxu0 0.0
    %411 = vmatprep.subr.mxu0 0.0
    %412 = vmatpush1.msra.mxu0 0.0
    %413 = vmatprep.subr.mxu0 0.0
    %414 = vmatpush1.msra.mxu0 0.0
    %415 = vmatprep.subr.mxu0 0.0
    %416 = vmatpush1.msra.mxu0 0.0
    %417 = vmatprep.subr.mxu0 0.0
    %418 = vmatpush1.msra.mxu0 0.0
    %419 = vmatprep.subr.mxu0 0.0
    %420 = vmatpush1.msra.mxu0 0.0
    %421 = vmatprep.subr.mxu0 0.0
    %422 = vmatpush1.msra.mxu0 0.0
    %423 = vmatprep.subr.mxu0 0.0
    %424 = vmatpush1.msra.mxu0 0.0
    %425 = vmatprep.subr.mxu0 0.0
    %426 = vmatpush1.msra.mxu0 0.0
    %427 = vmatprep.subr.mxu0 0.0
    %428 = vmatpush1.msra.mxu0 0.0
    %429 = vmatprep.subr.mxu0 0.0
    %430 = vmatpush1.msra.mxu0 0.0
    %431 = vmatprep.subr.mxu0 0.0
    %432 = vmatpush1.msra.mxu0 0.0
    %433 = vmatprep.subr.mxu0 0.0
    %434 = vmatpush1.msra.mxu0 0.0
    %435 = vmatprep.subr.mxu0 0.0
    %436 = vmatpush1.msra.mxu0 0.0
    %437 = vmatprep.subr.mxu0 0.0
    %438 = vmatpush1.msra.mxu0 0.0
    %439 = vmatprep.subr.mxu0 0.0
    %440 = vmatpush1.msra.mxu0 0.0
    %441 = vmatprep.subr.mxu0 0.0
    %442 = vmatpush1.msra.mxu0 0.0
    %443 = vmatprep.mubr.f32.mxu0 0.0
    %444 = vmatmul.mubr.f32.gmra.mrb[0].mxu0 %v118
    %v445 = vpop.f32.mrb[0].mxu0
    %v446 = vadd.f32 0.0, %v445
    %v447 = vpop.f32.mrb[0].mxu0
    %448 = vmatprep.mubr.f32.mxu0 0.0
    %449 = vmatmul.mubr.f32.gmra.mrb[0].mxu0 %v121
    %v450 = vpop.f32.mrb[0].mxu0
    %v451 = vadd.f32 0.0, %v450
    %v452 = vpop.f32.mrb[0].mxu0
    %453 = vdwg.mxu0
    %s454 = scalar_lea.vmem %s1, 160
    %v455 = vld [vmem:[%s454] sm:$0xff]
    %v456 = vld [vmem:[%s454 + $0x8] sm:$0xff]
    %v457 = vld [vmem:[%s454 + $0x10] sm:$0xff]
    %v458 = vld [vmem:[%s454 + $0x18] sm:$0xff]
    %459 = vmatprep.subr.mxu0 0.0
    %460 = vmatpush1.msra.mxu0 %v455
    %461 = vmatprep.subr.mxu0 0.0
    %462 = vmatpush1.msra.mxu0 %v456
    %463 = vmatprep.subr.mxu0 0.0
    %464 = vmatpush1.msra.mxu0 %v457
    %465 = vmatprep.subr.mxu0 0.0
    %466 = vmatpush1.msra.mxu0 %v458
    %467 = vmatprep.subr.mxu0 0.0
    %468 = vmatpush1.msra.mxu0 0.0
    %469 = vmatprep.subr.mxu0 0.0
    %470 = vmatpush1.msra.mxu0 0.0
    %471 = vmatprep.subr.mxu0 0.0
    %472 = vmatpush1.msra.mxu0 0.0
    %473 = vmatprep.subr.mxu0 0.0
    %474 = vmatpush1.msra.mxu0 0.0
    %475 = vmatprep.subr.mxu0 0.0
    %476 = vmatpush1.msra.mxu0 0.0
    %477 = vmatprep.subr.mxu0 0.0
    %478 = vmatpush1.msra.mxu0 0.0
    %479 = vmatprep.subr.mxu0 0.0
    %480 = vmatpush1.msra.mxu0 0.0
    %481 = vmatprep.subr.mxu0 0.0
    %482 = vmatpush1.msra.mxu0 0.0
    %483 = vmatprep.subr.mxu0 0.0
    %484 = vmatpush1.msra.mxu0 0.0
    %485 = vmatprep.subr.mxu0 0.0
    %486 = vmatpush1.msra.mxu0 0.0
    %487 = vmatprep.subr.mxu0 0.0
    %488 = vmatpush1.msra.mxu0 0.0
    %489 = vmatprep.subr.mxu0 0.0
    %490 = vmatpush1.msra.mxu0 0.0
    %491 = vmatprep.subr.mxu0 0.0
    %492 = vmatpush1.msra.mxu0 0.0
    %493 = vmatprep.subr.mxu0 0.0
    %494 = vmatpush1.msra.mxu0 0.0
    %495 = vmatprep.subr.mxu0 0.0
    %496 = vmatpush1.msra.mxu0 0.0
    %497 = vmatprep.subr.mxu0 0.0
    %498 = vmatpush1.msra.mxu0 0.0
    %499 = vmatprep.subr.mxu0 0.0
    %500 = vmatpush1.msra.mxu0 0.0
    %501 = vmatprep.subr.mxu0 0.0
    %502 = vmatpush1.msra.mxu0 0.0
    %503 = vmatprep.subr.mxu0 0.0
    %504 = vmatpush1.msra.mxu0 0.0
    %505 = vmatprep.subr.mxu0 0.0
    %506 = vmatpush1.msra.mxu0 0.0
    %507 = vmatprep.subr.mxu0 0.0
    %508 = vmatpush1.msra.mxu0 0.0
    %509 = vmatprep.subr.mxu0 0.0
    %510 = vmatpush1.msra.mxu0 0.0
    %511 = vmatprep.subr.mxu0 0.0
    %512 = vmatpush1.msra.mxu0 0.0
    %513 = vmatprep.subr.mxu0 0.0
    %514 = vmatpush1.msra.mxu0 0.0
    %515 = vmatprep.subr.mxu0 0.0
    %516 = vmatpush1.msra.mxu0 0.0
    %517 = vmatprep.subr.mxu0 0.0
    %518 = vmatpush1.msra.mxu0 0.0
    %519 = vmatprep.subr.mxu0 0.0
    %520 = vmatpush1.msra.mxu0 0.0
    %521 = vmatprep.subr.mxu0 0.0
    %522 = vmatpush1.msra.mxu0 0.0
    %523 = vmatprep.mubr.f32.mxu0 0.0
    %524 = vmatmul.mubr.f32.gmra.mrb[0].mxu0 %v204
    %v525 = vpop.f32.mrb[0].mxu0
    %v526 = vadd.f32 0.0, %v525
    %v527 = vpop.f32.mrb[0].mxu0
    %528 = vmatprep.mubr.f32.mxu0 0.0
    %529 = vmatmul.mubr.f32.gmra.mrb[0].mxu0 %v207
    %v530 = vpop.f32.mrb[0].mxu0
    %v531 = vadd.f32 0.0, %v530
    %v532 = vpop.f32.mrb[0].mxu0
    %533 = vdwg.mxu0
    %s534 = scalar_lea.vmem [#allocation2], 16
    %535 = vst.msk [vmem:[%s534] sm:$0xff] %vm284, %v366
    %s536 = scalar_lea.vmem [#allocation3], 16
    %537 = vst.msk [vmem:[%s536] sm:$0xff] %vm284, %v446
    %s538 = scalar_lea.vmem [#allocation4], 16
    %539 = vst.msk [vmem:[%s538] sm:$0xff] %vm284, %v526
    %s540 = scalar_lea.vmem [#allocation2], 24
    %541 = vst.msk [vmem:[%s540] sm:$0xff] %vm284, %v371
    %s542 = scalar_lea.vmem [#allocation3], 24
    %543 = vst.msk [vmem:[%s542] sm:$0xff] %vm284, %v451
    %s544 = scalar_lea.vmem [#allocation4], 24
    %545 = vst.msk [vmem:[%s544] sm:$0xff] %vm284, %v531
    %v546 = vld [vmem:[#allocation2] sm:$0xff]
    %v547 = vld [vmem:[#allocation2 + $0x8] sm:$0xff]
    %v548 = vld [vmem:[#allocation2 + $0x10] sm:$0xff]
    %v549 = vld [vmem:[#allocation2 + $0x18] sm:$0xff]
    %v550 = vld [vmem:[#allocation3] sm:$0xff]
    %v551 = vld [vmem:[#allocation3 + $0x8] sm:$0xff]
    %v552 = vld [vmem:[#allocation3 + $0x10] sm:$0xff]
    %v553 = vld [vmem:[#allocation3 + $0x18] sm:$0xff]
    %v554 = vld [vmem:[#allocation4] sm:$0xff]
    %v555 = vld [vmem:[#allocation4 + $0x8] sm:$0xff]
    %v556 = vld [vmem:[#allocation4 + $0x10] sm:$0xff]
    %v557 = vld [vmem:[#allocation4 + $0x18] sm:$0xff]
    %v559 = vsel %vm284, %v546, 0
    %v562 = vsel %vm284, %v550, 0
    %564 = vmatprep.subr.mxu0 0.0
    %565 = vmatpush1.xpose.msra.mxu0 %v562
    %566 = vmatprep.subr.mxu0 0.0
    %567 = vmatpush1.xpose.msra.mxu0 0.0
    %568 = vmatprep.subr.mxu0 0.0
    %569 = vmatpush1.xpose.msra.mxu0 0.0
    %570 = vmatprep.subr.mxu0 0.0
    %571 = vmatpush1.xpose.msra.mxu0 0.0
    %572 = vmatprep.subr.mxu0 0.0
    %573 = vmatpush1.xpose.msra.mxu0 0.0
    %574 = vmatprep.subr.mxu0 0.0
    %575 = vmatpush1.xpose.msra.mxu0 0.0
    %576 = vmatprep.subr.mxu0 0.0
    %577 = vmatpush1.xpose.msra.mxu0 0.0
    %578 = vmatprep.subr.mxu0 0.0
    %579 = vmatpush1.xpose.msra.mxu0 0.0
    %580 = vmatprep.subr.mxu0 0.0
    %581 = vmatpush1.xpose.msra.mxu0 0.0
    %582 = vmatprep.subr.mxu0 0.0
    %583 = vmatpush1.xpose.msra.mxu0 0.0
    %584 = vmatprep.subr.mxu0 0.0
    %585 = vmatpush1.xpose.msra.mxu0 0.0
    %586 = vmatprep.subr.mxu0 0.0
    %587 = vmatpush1.xpose.msra.mxu0 0.0
    %588 = vmatprep.subr.mxu0 0.0
    %589 = vmatpush1.xpose.msra.mxu0 0.0
    %590 = vmatprep.subr.mxu0 0.0
    %591 = vmatpush1.xpose.msra.mxu0 0.0
    %592 = vmatprep.subr.mxu0 0.0
    %593 = vmatpush1.xpose.msra.mxu0 0.0
    %594 = vmatprep.subr.mxu0 0.0
    %595 = vmatpush1.xpose.msra.mxu0 0.0
    %596 = vmatprep.subr.mxu0 0.0
    %597 = vmatpush1.xpose.msra.mxu0 0.0
    %598 = vmatprep.subr.mxu0 0.0
    %599 = vmatpush1.xpose.msra.mxu0 0.0
    %600 = vmatprep.subr.mxu0 0.0
    %601 = vmatpush1.xpose.msra.mxu0 0.0
    %602 = vmatprep.subr.mxu0 0.0
    %603 = vmatpush1.xpose.msra.mxu0 0.0
    %604 = vmatprep.subr.mxu0 0.0
    %605 = vmatpush1.xpose.msra.mxu0 0.0
    %606 = vmatprep.subr.mxu0 0.0
    %607 = vmatpush1.xpose.msra.mxu0 0.0
    %608 = vmatprep.subr.mxu0 0.0
    %609 = vmatpush1.xpose.msra.mxu0 0.0
    %610 = vmatprep.subr.mxu0 0.0
    %611 = vmatpush1.xpose.msra.mxu0 0.0
    %612 = vmatprep.subr.mxu0 0.0
    %613 = vmatpush1.xpose.msra.mxu0 0.0
    %614 = vmatprep.subr.mxu0 0.0
    %615 = vmatpush1.xpose.msra.mxu0 0.0
    %616 = vmatprep.subr.mxu0 0.0
    %617 = vmatpush1.xpose.msra.mxu0 0.0
    %618 = vmatprep.subr.mxu0 0.0
    %619 = vmatpush1.xpose.msra.mxu0 0.0
    %620 = vmatprep.subr.mxu0 0.0
    %621 = vmatpush1.xpose.msra.mxu0 0.0
    %622 = vmatprep.subr.mxu0 0.0
    %623 = vmatpush1.xpose.msra.mxu0 0.0
    %624 = vmatprep.subr.mxu0 0.0
    %625 = vmatpush1.xpose.msra.mxu0 0.0
    %626 = vmatprep.subr.mxu0 0.0
    %627 = vmatpush1.xpose.msra.mxu0 0.0
    %628 = vmatprep.mubr.f32.mxu0 0.0
    %629 = vmatmul.mubr.f32.gmra.mrb[0].mxu0 %v559
    %v630 = vpop.f32.mrb[0].mxu0
    %v631 = vadd.f32 0.0, %v630
    %v632 = vpop.f32.mrb[0].mxu0
    %633 = vdwg.mxu0
    %v635 = vsel %vm284, %v547, 0
    %v638 = vsel %vm284, %v551, 0
    %640 = vmatprep.subr.mxu0 0.0
    %641 = vmatpush1.xpose.msra.mxu0 %v638
    %642 = vmatprep.subr.mxu0 0.0
    %643 = vmatpush1.xpose.msra.mxu0 0.0
    %644 = vmatprep.subr.mxu0 0.0
    %645 = vmatpush1.xpose.msra.mxu0 0.0
    %646 = vmatprep.subr.mxu0 0.0
    %647 = vmatpush1.xpose.msra.mxu0 0.0
    %648 = vmatprep.subr.mxu0 0.0
    %649 = vmatpush1.xpose.msra.mxu0 0.0
    %650 = vmatprep.subr.mxu0 0.0
    %651 = vmatpush1.xpose.msra.mxu0 0.0
    %652 = vmatprep.subr.mxu0 0.0
    %653 = vmatpush1.xpose.msra.mxu0 0.0
    %654 = vmatprep.subr.mxu0 0.0
    %655 = vmatpush1.xpose.msra.mxu0 0.0
    %656 = vmatprep.subr.mxu0 0.0
    %657 = vmatpush1.xpose.msra.mxu0 0.0
    %658 = vmatprep.subr.mxu0 0.0
    %659 = vmatpush1.xpose.msra.mxu0 0.0
    %660 = vmatprep.subr.mxu0 0.0
    %661 = vmatpush1.xpose.msra.mxu0 0.0
    %662 = vmatprep.subr.mxu0 0.0
    %663 = vmatpush1.xpose.msra.mxu0 0.0
    %664 = vmatprep.subr.mxu0 0.0
    %665 = vmatpush1.xpose.msra.mxu0 0.0
    %666 = vmatprep.subr.mxu0 0.0
    %667 = vmatpush1.xpose.msra.mxu0 0.0
    %668 = vmatprep.subr.mxu0 0.0
    %669 = vmatpush1.xpose.msra.mxu0 0.0
    %670 = vmatprep.subr.mxu0 0.0
    %671 = vmatpush1.xpose.msra.mxu0 0.0
    %672 = vmatprep.subr.mxu0 0.0
    %673 = vmatpush1.xpose.msra.mxu0 0.0
    %674 = vmatprep.subr.mxu0 0.0
    %675 = vmatpush1.xpose.msra.mxu0 0.0
    %676 = vmatprep.subr.mxu0 0.0
    %677 = vmatpush1.xpose.msra.mxu0 0.0
    %678 = vmatprep.subr.mxu0 0.0
    %679 = vmatpush1.xpose.msra.mxu0 0.0
    %680 = vmatprep.subr.mxu0 0.0
    %681 = vmatpush1.xpose.msra.mxu0 0.0
    %682 = vmatprep.subr.mxu0 0.0
    %683 = vmatpush1.xpose.msra.mxu0 0.0
    %684 = vmatprep.subr.mxu0 0.0
    %685 = vmatpush1.xpose.msra.mxu0 0.0
    %686 = vmatprep.subr.mxu0 0.0
    %687 = vmatpush1.xpose.msra.mxu0 0.0
    %688 = vmatprep.subr.mxu0 0.0
    %689 = vmatpush1.xpose.msra.mxu0 0.0
    %690 = vmatprep.subr.mxu0 0.0
    %691 = vmatpush1.xpose.msra.mxu0 0.0
    %692 = vmatprep.subr.mxu0 0.0
    %693 = vmatpush1.xpose.msra.mxu0 0.0
    %694 = vmatprep.subr.mxu0 0.0
    %695 = vmatpush1.xpose.msra.mxu0 0.0
    %696 = vmatprep.subr.mxu0 0.0
    %697 = vmatpush1.xpose.msra.mxu0 0.0
    %698 = vmatprep.subr.mxu0 0.0
    %699 = vmatpush1.xpose.msra.mxu0 0.0
    %700 = vmatprep.subr.mxu0 0.0
    %701 = vmatpush1.xpose.msra.mxu0 0.0
    %702 = vmatprep.subr.mxu0 0.0
    %703 = vmatpush1.xpose.msra.mxu0 0.0
    %704 = vmatprep.mubr.f32.mxu0 0.0
    %705 = vmatmul.mubr.f32.gmra.mrb[0].mxu0 %v635
    %v706 = vpop.f32.mrb[0].mxu0
    %v707 = vadd.f32 0.0, %v706
    %v708 = vpop.f32.mrb[0].mxu0
    %709 = vdwg.mxu0
    %v711 = vsel %vm284, %v548, 0
    %v714 = vsel %vm284, %v552, 0
    %716 = vmatprep.subr.mxu0 0.0
    %717 = vmatpush1.xpose.msra.mxu0 %v714
    %718 = vmatprep.subr.mxu0 0.0
    %719 = vmatpush1.xpose.msra.mxu0 0.0
    %720 = vmatprep.subr.mxu0 0.0
    %721 = vmatpush1.xpose.msra.mxu0 0.0
    %722 = vmatprep.subr.mxu0 0.0
    %723 = vmatpush1.xpose.msra.mxu0 0.0
    %724 = vmatprep.subr.mxu0 0.0
    %725 = vmatpush1.xpose.msra.mxu0 0.0
    %726 = vmatprep.subr.mxu0 0.0
    %727 = vmatpush1.xpose.msra.mxu0 0.0
    %728 = vmatprep.subr.mxu0 0.0
    %729 = vmatpush1.xpose.msra.mxu0 0.0
    %730 = vmatprep.subr.mxu0 0.0
    %731 = vmatpush1.xpose.msra.mxu0 0.0
    %732 = vmatprep.subr.mxu0 0.0
    %733 = vmatpush1.xpose.msra.mxu0 0.0
    %734 = vmatprep.subr.mxu0 0.0
    %735 = vmatpush1.xpose.msra.mxu0 0.0
    %736 = vmatprep.subr.mxu0 0.0
    %737 = vmatpush1.xpose.msra.mxu0 0.0
    %738 = vmatprep.subr.mxu0 0.0
    %739 = vmatpush1.xpose.msra.mxu0 0.0
    %740 = vmatprep.subr.mxu0 0.0
    %741 = vmatpush1.xpose.msra.mxu0 0.0
    %742 = vmatprep.subr.mxu0 0.0
    %743 = vmatpush1.xpose.msra.mxu0 0.0
    %744 = vmatprep.subr.mxu0 0.0
    %745 = vmatpush1.xpose.msra.mxu0 0.0
    %746 = vmatprep.subr.mxu0 0.0
    %747 = vmatpush1.xpose.msra.mxu0 0.0
    %748 = vmatprep.subr.mxu0 0.0
    %749 = vmatpush1.xpose.msra.mxu0 0.0
    %750 = vmatprep.subr.mxu0 0.0
    %751 = vmatpush1.xpose.msra.mxu0 0.0
    %752 = vmatprep.subr.mxu0 0.0
    %753 = vmatpush1.xpose.msra.mxu0 0.0
    %754 = vmatprep.subr.mxu0 0.0
    %755 = vmatpush1.xpose.msra.mxu0 0.0
    %756 = vmatprep.subr.mxu0 0.0
    %757 = vmatpush1.xpose.msra.mxu0 0.0
    %758 = vmatprep.subr.mxu0 0.0
    %759 = vmatpush1.xpose.msra.mxu0 0.0
    %760 = vmatprep.subr.mxu0 0.0
    %761 = vmatpush1.xpose.msra.mxu0 0.0
    %762 = vmatprep.subr.mxu0 0.0
    %763 = vmatpush1.xpose.msra.mxu0 0.0
    %764 = vmatprep.subr.mxu0 0.0
    %765 = vmatpush1.xpose.msra.mxu0 0.0
    %766 = vmatprep.subr.mxu0 0.0
    %767 = vmatpush1.xpose.msra.mxu0 0.0
    %768 = vmatprep.subr.mxu0 0.0
    %769 = vmatpush1.xpose.msra.mxu0 0.0
    %770 = vmatprep.subr.mxu0 0.0
    %771 = vmatpush1.xpose.msra.mxu0 0.0
    %772 = vmatprep.subr.mxu0 0.0
    %773 = vmatpush1.xpose.msra.mxu0 0.0
    %774 = vmatprep.subr.mxu0 0.0
    %775 = vmatpush1.xpose.msra.mxu0 0.0
    %776 = vmatprep.subr.mxu0 0.0
    %777 = vmatpush1.xpose.msra.mxu0 0.0
    %778 = vmatprep.subr.mxu0 0.0
    %779 = vmatpush1.xpose.msra.mxu0 0.0
    %780 = vmatprep.mubr.f32.mxu0 0.0
    %781 = vmatmul.mubr.f32.gmra.mrb[0].mxu0 %v711
    %v782 = vpop.f32.mrb[0].mxu0
    %v783 = vadd.f32 0.0, %v782
    %v784 = vpop.f32.mrb[0].mxu0
    %785 = vdwg.mxu0
    %v787 = vsel %vm284, %v549, 0
    %v790 = vsel %vm284, %v553, 0
    %792 = vmatprep.subr.mxu0 0.0
    %793 = vmatpush1.xpose.msra.mxu0 %v790
    %794 = vmatprep.subr.mxu0 0.0
    %795 = vmatpush1.xpose.msra.mxu0 0.0
    %796 = vmatprep.subr.mxu0 0.0
    %797 = vmatpush1.xpose.msra.mxu0 0.0
    %798 = vmatprep.subr.mxu0 0.0
    %799 = vmatpush1.xpose.msra.mxu0 0.0
    %800 = vmatprep.subr.mxu0 0.0
    %801 = vmatpush1.xpose.msra.mxu0 0.0
    %802 = vmatprep.subr.mxu0 0.0
    %803 = vmatpush1.xpose.msra.mxu0 0.0
    %804 = vmatprep.subr.mxu0 0.0
    %805 = vmatpush1.xpose.msra.mxu0 0.0
    %806 = vmatprep.subr.mxu0 0.0
    %807 = vmatpush1.xpose.msra.mxu0 0.0
    %808 = vmatprep.subr.mxu0 0.0
    %809 = vmatpush1.xpose.msra.mxu0 0.0
    %810 = vmatprep.subr.mxu0 0.0
    %811 = vmatpush1.xpose.msra.mxu0 0.0
    %812 = vmatprep.subr.mxu0 0.0
    %813 = vmatpush1.xpose.msra.mxu0 0.0
    %814 = vmatprep.subr.mxu0 0.0
    %815 = vmatpush1.xpose.msra.mxu0 0.0
    %816 = vmatprep.subr.mxu0 0.0
    %817 = vmatpush1.xpose.msra.mxu0 0.0
    %818 = vmatprep.subr.mxu0 0.0
    %819 = vmatpush1.xpose.msra.mxu0 0.0
    %820 = vmatprep.subr.mxu0 0.0
    %821 = vmatpush1.xpose.msra.mxu0 0.0
    %822 = vmatprep.subr.mxu0 0.0
    %823 = vmatpush1.xpose.msra.mxu0 0.0
    %824 = vmatprep.subr.mxu0 0.0
    %825 = vmatpush1.xpose.msra.mxu0 0.0
    %826 = vmatprep.subr.mxu0 0.0
    %827 = vmatpush1.xpose.msra.mxu0 0.0
    %828 = vmatprep.subr.mxu0 0.0
    %829 = vmatpush1.xpose.msra.mxu0 0.0
    %830 = vmatprep.subr.mxu0 0.0
    %831 = vmatpush1.xpose.msra.mxu0 0.0
    %832 = vmatprep.subr.mxu0 0.0
    %833 = vmatpush1.xpose.msra.mxu0 0.0
    %834 = vmatprep.subr.mxu0 0.0
    %835 = vmatpush1.xpose.msra.mxu0 0.0
    %836 = vmatprep.subr.mxu0 0.0
    %837 = vmatpush1.xpose.msra.mxu0 0.0
    %838 = vmatprep.subr.mxu0 0.0
    %839 = vmatpush1.xpose.msra.mxu0 0.0
    %840 = vmatprep.subr.mxu0 0.0
    %841 = vmatpush1.xpose.msra.mxu0 0.0
    %842 = vmatprep.subr.mxu0 0.0
    %843 = vmatpush1.xpose.msra.mxu0 0.0
    %844 = vmatprep.subr.mxu0 0.0
    %845 = vmatpush1.xpose.msra.mxu0 0.0
    %846 = vmatprep.subr.mxu0 0.0
    %847 = vmatpush1.xpose.msra.mxu0 0.0
    %848 = vmatprep.subr.mxu0 0.0
    %849 = vmatpush1.xpose.msra.mxu0 0.0
    %850 = vmatprep.subr.mxu0 0.0
    %851 = vmatpush1.xpose.msra.mxu0 0.0
    %852 = vmatprep.subr.mxu0 0.0
    %853 = vmatpush1.xpose.msra.mxu0 0.0
    %854 = vmatprep.subr.mxu0 0.0
    %855 = vmatpush1.xpose.msra.mxu0 0.0
    %856 = vmatprep.mubr.f32.mxu0 0.0
    %857 = vmatmul.mubr.f32.gmra.mrb[0].mxu0 %v787
    %v858 = vpop.f32.mrb[0].mxu0
    %v859 = vadd.f32 0.0, %v858
    %v860 = vpop.f32.mrb[0].mxu0
    %861 = vdwg.mxu0
    %vm862 = vcmask 64512
    %v863 = vsel %vm862, %v631, -inf
    %864 = vmax.xlane.f32.xlu0 %v863
    %v865 = vpop.xlane.xlu0 %864
    %v866 = vsel %vm862, %v707, -inf
    %867 = vmax.xlane.f32.xlu0 %v866
    %v868 = vpop.xlane.xlu0 %867
    %v869 = vsel %vm862, %v783, -inf
    %870 = vmax.xlane.f32.xlu0 %v869
    %v871 = vpop.xlane.xlu0 %870
    %v872 = vsel %vm862, %v859, -inf
    %873 = vmax.xlane.f32.xlu0 %v872
    %v874 = vpop.xlane.xlu0 %873
    %v875 = vsub.f32 %v631, %v865
    %v876 = vsub.f32 %v707, %v868
    %v877 = vsub.f32 %v783, %v871
    %v878 = vsub.f32 %v859, %v874
    %v879 = vmul.f32 %v875, 1.442695
    %v880 = vpow.pop %v879
    %v881 = vmul.f32 %v876, 1.442695
    %v882 = vpow.pop %v881
    %v883 = vmul.f32 %v877, 1.442695
    %v884 = vpow.pop %v883
    %v885 = vmul.f32 %v878, 1.442695
    %v886 = vpow.pop %v885
    %v887 = vsel %vm862, %v880, 0.0
    %888 = vadd.xlane.f32.xlu0 %v887
    %v889 = vpop.xlane.xlu0 %888
    %v890 = vsel %vm862, %v882, 0.0
    %891 = vadd.xlane.f32.xlu0 %v890
    %v892 = vpop.xlane.xlu0 %891
    %v893 = vsel %vm862, %v884, 0.0
    %894 = vadd.xlane.f32.xlu0 %v893
    %v895 = vpop.xlane.xlu0 %894
    %v896 = vsel %vm862, %v886, 0.0
    %897 = vadd.xlane.f32.xlu0 %v896
    %v898 = vpop.xlane.xlu0 %897
    %v899 = vrcp.pop %v889
    %v900 = vrcp.pop %v892
    %v901 = vrcp.pop %v895
    %v902 = vrcp.pop %v898
    %v903 = vmul.f32 %v880, %v899
    %v904 = vmul.f32 %v882, %v900
    %v905 = vmul.f32 %v884, %v901
    %v906 = vmul.f32 %v886, %v902
    %v908 = vsel %vm862, %v903, 0
    %910 = vmatprep.subr.mxu0 0.0
    %911 = vmatpush1.msra.mxu0 %v554
    %912 = vmatprep.subr.mxu0 0.0
    %913 = vmatpush1.msra.mxu0 0.0
    %914 = vmatprep.subr.mxu0 0.0
    %915 = vmatpush1.msra.mxu0 0.0
    %916 = vmatprep.subr.mxu0 0.0
    %917 = vmatpush1.msra.mxu0 0.0
    %918 = vmatprep.subr.mxu0 0.0
    %919 = vmatpush1.msra.mxu0 0.0
    %920 = vmatprep.subr.mxu0 0.0
    %921 = vmatpush1.msra.mxu0 0.0
    %922 = vmatprep.subr.mxu0 0.0
    %923 = vmatpush1.msra.mxu0 0.0
    %924 = vmatprep.subr.mxu0 0.0
    %925 = vmatpush1.msra.mxu0 0.0
    %926 = vmatprep.subr.mxu0 0.0
    %927 = vmatpush1.msra.mxu0 0.0
    %928 = vmatprep.subr.mxu0 0.0
    %929 = vmatpush1.msra.mxu0 0.0
    %930 = vmatprep.subr.mxu0 0.0
    %931 = vmatpush1.msra.mxu0 0.0
    %932 = vmatprep.subr.mxu0 0.0
    %933 = vmatpush1.msra.mxu0 0.0
    %934 = vmatprep.subr.mxu0 0.0
    %935 = vmatpush1.msra.mxu0 0.0
    %936 = vmatprep.subr.mxu0 0.0
    %937 = vmatpush1.msra.mxu0 0.0
    %938 = vmatprep.subr.mxu0 0.0
    %939 = vmatpush1.msra.mxu0 0.0
    %940 = vmatprep.subr.mxu0 0.0
    %941 = vmatpush1.msra.mxu0 0.0
    %942 = vmatprep.subr.mxu0 0.0
    %943 = vmatpush1.msra.mxu0 0.0
    %944 = vmatprep.subr.mxu0 0.0
    %945 = vmatpush1.msra.mxu0 0.0
    %946 = vmatprep.subr.mxu0 0.0
    %947 = vmatpush1.msra.mxu0 0.0
    %948 = vmatprep.subr.mxu0 0.0
    %949 = vmatpush1.msra.mxu0 0.0
    %950 = vmatprep.subr.mxu0 0.0
    %951 = vmatpush1.msra.mxu0 0.0
    %952 = vmatprep.subr.mxu0 0.0
    %953 = vmatpush1.msra.mxu0 0.0
    %954 = vmatprep.subr.mxu0 0.0
    %955 = vmatpush1.msra.mxu0 0.0
    %956 = vmatprep.subr.mxu0 0.0
    %957 = vmatpush1.msra.mxu0 0.0
    %958 = vmatprep.subr.mxu0 0.0
    %959 = vmatpush1.msra.mxu0 0.0
    %960 = vmatprep.subr.mxu0 0.0
    %961 = vmatpush1.msra.mxu0 0.0
    %962 = vmatprep.subr.mxu0 0.0
    %963 = vmatpush1.msra.mxu0 0.0
    %964 = vmatprep.subr.mxu0 0.0
    %965 = vmatpush1.msra.mxu0 0.0
    %966 = vmatprep.subr.mxu0 0.0
    %967 = vmatpush1.msra.mxu0 0.0
    %968 = vmatprep.subr.mxu0 0.0
    %969 = vmatpush1.msra.mxu0 0.0
    %970 = vmatprep.subr.mxu0 0.0
    %971 = vmatpush1.msra.mxu0 0.0
    %972 = vmatprep.subr.mxu0 0.0
    %973 = vmatpush1.msra.mxu0 0.0
    %974 = vmatprep.mubr.f32.mxu0 0.0
    %975 = vmatmul.mubr.f32.gmra.mrb[0].mxu0 %v908
    %v976 = vpop.f32.mrb[0].mxu0
    %v977 = vadd.f32 0.0, %v976
    %v978 = vpop.f32.mrb[0].mxu0
    %979 = vdwg.mxu0
    %v981 = vsel %vm862, %v904, 0
    %983 = vmatprep.subr.mxu0 0.0
    %984 = vmatpush1.msra.mxu0 %v555
    %985 = vmatprep.subr.mxu0 0.0
    %986 = vmatpush1.msra.mxu0 0.0
    %987 = vmatprep.subr.mxu0 0.0
    %988 = vmatpush1.msra.mxu0 0.0
    %989 = vmatprep.subr.mxu0 0.0
    %990 = vmatpush1.msra.mxu0 0.0
    %991 = vmatprep.subr.mxu0 0.0
    %992 = vmatpush1.msra.mxu0 0.0
    %993 = vmatprep.subr.mxu0 0.0
    %994 = vmatpush1.msra.mxu0 0.0
    %995 = vmatprep.subr.mxu0 0.0
    %996 = vmatpush1.msra.mxu0 0.0
    %997 = vmatprep.subr.mxu0 0.0
    %998 = vmatpush1.msra.mxu0 0.0
    %999 = vmatprep.subr.mxu0 0.0
    %1000 = vmatpush1.msra.mxu0 0.0
    %1001 = vmatprep.subr.mxu0 0.0
    %1002 = vmatpush1.msra.mxu0 0.0
    %1003 = vmatprep.subr.mxu0 0.0
    %1004 = vmatpush1.msra.mxu0 0.0
    %1005 = vmatprep.subr.mxu0 0.0
    %1006 = vmatpush1.msra.mxu0 0.0
    %1007 = vmatprep.subr.mxu0 0.0
    %1008 = vmatpush1.msra.mxu0 0.0
    %1009 = vmatprep.subr.mxu0 0.0
    %1010 = vmatpush1.msra.mxu0 0.0
    %1011 = vmatprep.subr.mxu0 0.0
    %1012 = vmatpush1.msra.mxu0 0.0
    %1013 = vmatprep.subr.mxu0 0.0
    %1014 = vmatpush1.msra.mxu0 0.0
    %1015 = vmatprep.subr.mxu0 0.0
    %1016 = vmatpush1.msra.mxu0 0.0
    %1017 = vmatprep.subr.mxu0 0.0
    %1018 = vmatpush1.msra.mxu0 0.0
    %1019 = vmatprep.subr.mxu0 0.0
    %1020 = vmatpush1.msra.mxu0 0.0
    %1021 = vmatprep.subr.mxu0 0.0
    %1022 = vmatpush1.msra.mxu0 0.0
    %1023 = vmatprep.subr.mxu0 0.0
    %1024 = vmatpush1.msra.mxu0 0.0
    %1025 = vmatprep.subr.mxu0 0.0
    %1026 = vmatpush1.msra.mxu0 0.0
    %1027 = vmatprep.subr.mxu0 0.0
    %1028 = vmatpush1.msra.mxu0 0.0
    %1029 = vmatprep.subr.mxu0 0.0
    %1030 = vmatpush1.msra.mxu0 0.0
    %1031 = vmatprep.subr.mxu0 0.0
    %1032 = vmatpush1.msra.mxu0 0.0
    %1033 = vmatprep.subr.mxu0 0.0
    %1034 = vmatpush1.msra.mxu0 0.0
    %1035 = vmatprep.subr.mxu0 0.0
    %1036 = vmatpush1.msra.mxu0 0.0
    %1037 = vmatprep.subr.mxu0 0.0
    %1038 = vmatpush1.msra.mxu0 0.0
    %1039 = vmatprep.subr.mxu0 0.0
    %1040 = vmatpush1.msra.mxu0 0.0
    %1041 = vmatprep.subr.mxu0 0.0
    %1042 = vmatpush1.msra.mxu0 0.0
    %1043 = vmatprep.subr.mxu0 0.0
    %1044 = vmatpush1.msra.mxu0 0.0
    %1045 = vmatprep.subr.mxu0 0.0
    %1046 = vmatpush1.msra.mxu0 0.0
    %1047 = vmatprep.mubr.f32.mxu0 0.0
    %1048 = vmatmul.mubr.f32.gmra.mrb[0].mxu0 %v981
    %v1049 = vpop.f32.mrb[0].mxu0
    %v1050 = vadd.f32 0.0, %v1049
    %v1051 = vpop.f32.mrb[0].mxu0
    %1052 = vdwg.mxu0
    %v1054 = vsel %vm862, %v905, 0
    %1056 = vmatprep.subr.mxu0 0.0
    %1057 = vmatpush1.msra.mxu0 %v556
    %1058 = vmatprep.subr.mxu0 0.0
    %1059 = vmatpush1.msra.mxu0 0.0
    %1060 = vmatprep.subr.mxu0 0.0
    %1061 = vmatpush1.msra.mxu0 0.0
    %1062 = vmatprep.subr.mxu0 0.0
    %1063 = vmatpush1.msra.mxu0 0.0
    %1064 = vmatprep.subr.mxu0 0.0
    %1065 = vmatpush1.msra.mxu0 0.0
    %1066 = vmatprep.subr.mxu0 0.0
    %1067 = vmatpush1.msra.mxu0 0.0
    %1068 = vmatprep.subr.mxu0 0.0
    %1069 = vmatpush1.msra.mxu0 0.0
    %1070 = vmatprep.subr.mxu0 0.0
    %1071 = vmatpush1.msra.mxu0 0.0
    %1072 = vmatprep.subr.mxu0 0.0
    %1073 = vmatpush1.msra.mxu0 0.0
    %1074 = vmatprep.subr.mxu0 0.0
    %1075 = vmatpush1.msra.mxu0 0.0
    %1076 = vmatprep.subr.mxu0 0.0
    %1077 = vmatpush1.msra.mxu0 0.0
    %1078 = vmatprep.subr.mxu0 0.0
    %1079 = vmatpush1.msra.mxu0 0.0
    %1080 = vmatprep.subr.mxu0 0.0
    %1081 = vmatpush1.msra.mxu0 0.0
    %1082 = vmatprep.subr.mxu0 0.0
    %1083 = vmatpush1.msra.mxu0 0.0
    %1084 = vmatprep.subr.mxu0 0.0
    %1085 = vmatpush1.msra.mxu0 0.0
    %1086 = vmatprep.subr.mxu0 0.0
    %1087 = vmatpush1.msra.mxu0 0.0
    %1088 = vmatprep.subr.mxu0 0.0
    %1089 = vmatpush1.msra.mxu0 0.0
    %1090 = vmatprep.subr.mxu0 0.0
    %1091 = vmatpush1.msra.mxu0 0.0
    %1092 = vmatprep.subr.mxu0 0.0
    %1093 = vmatpush1.msra.mxu0 0.0
    %1094 = vmatprep.subr.mxu0 0.0
    %1095 = vmatpush1.msra.mxu0 0.0
    %1096 = vmatprep.subr.mxu0 0.0
    %1097 = vmatpush1.msra.mxu0 0.0
    %1098 = vmatprep.subr.mxu0 0.0
    %1099 = vmatpush1.msra.mxu0 0.0
    %1100 = vmatprep.subr.mxu0 0.0
    %1101 = vmatpush1.msra.mxu0 0.0
    %1102 = vmatprep.subr.mxu0 0.0
    %1103 = vmatpush1.msra.mxu0 0.0
    %1104 = vmatprep.subr.mxu0 0.0
    %1105 = vmatpush1.msra.mxu0 0.0
    %1106 = vmatprep.subr.mxu0 0.0
    %1107 = vmatpush1.msra.mxu0 0.0
    %1108 = vmatprep.subr.mxu0 0.0
    %1109 = vmatpush1.msra.mxu0 0.0
    %1110 = vmatprep.subr.mxu0 0.0
    %1111 = vmatpush1.msra.mxu0 0.0
    %1112 = vmatprep.subr.mxu0 0.0
    %1113 = vmatpush1.msra.mxu0 0.0
    %1114 = vmatprep.subr.mxu0 0.0
    %1115 = vmatpush1.msra.mxu0 0.0
    %1116 = vmatprep.subr.mxu0 0.0
    %1117 = vmatpush1.msra.mxu0 0.0
    %1118 = vmatprep.subr.mxu0 0.0
    %1119 = vmatpush1.msra.mxu0 0.0
    %1120 = vmatprep.mubr.f32.mxu0 0.0
    %1121 = vmatmul.mubr.f32.gmra.mrb[0].mxu0 %v1054
    %v1122 = vpop.f32.mrb[0].mxu0
    %v1123 = vadd.f32 0.0, %v1122
    %v1124 = vpop.f32.mrb[0].mxu0
    %1125 = vdwg.mxu0
    %v1127 = vsel %vm862, %v906, 0
    %1129 = vmatprep.subr.mxu0 0.0
    %1130 = vmatpush1.msra.mxu0 %v557
    %1131 = vmatprep.subr.mxu0 0.0
    %1132 = vmatpush1.msra.mxu0 0.0
    %1133 = vmatprep.subr.mxu0 0.0
    %1134 = vmatpush1.msra.mxu0 0.0
    %1135 = vmatprep.subr.mxu0 0.0
    %1136 = vmatpush1.msra.mxu0 0.0
    %1137 = vmatprep.subr.mxu0 0.0
    %1138 = vmatpush1.msra.mxu0 0.0
    %1139 = vmatprep.subr.mxu0 0.0
    %1140 = vmatpush1.msra.mxu0 0.0
    %1141 = vmatprep.subr.mxu0 0.0
    %1142 = vmatpush1.msra.mxu0 0.0
    %1143 = vmatprep.subr.mxu0 0.0
    %1144 = vmatpush1.msra.mxu0 0.0
    %1145 = vmatprep.subr.mxu0 0.0
    %1146 = vmatpush1.msra.mxu0 0.0
    %1147 = vmatprep.subr.mxu0 0.0
    %1148 = vmatpush1.msra.mxu0 0.0
    %1149 = vmatprep.subr.mxu0 0.0
    %1150 = vmatpush1.msra.mxu0 0.0
    %1151 = vmatprep.subr.mxu0 0.0
    %1152 = vmatpush1.msra.mxu0 0.0
    %1153 = vmatprep.subr.mxu0 0.0
    %1154 = vmatpush1.msra.mxu0 0.0
    %1155 = vmatprep.subr.mxu0 0.0
    %1156 = vmatpush1.msra.mxu0 0.0
    %1157 = vmatprep.subr.mxu0 0.0
    %1158 = vmatpush1.msra.mxu0 0.0
    %1159 = vmatprep.subr.mxu0 0.0
    %1160 = vmatpush1.msra.mxu0 0.0
    %1161 = vmatprep.subr.mxu0 0.0
    %1162 = vmatpush1.msra.mxu0 0.0
    %1163 = vmatprep.subr.mxu0 0.0
    %1164 = vmatpush1.msra.mxu0 0.0
    %1165 = vmatprep.subr.mxu0 0.0
    %1166 = vmatpush1.msra.mxu0 0.0
    %1167 = vmatprep.subr.mxu0 0.0
    %1168 = vmatpush1.msra.mxu0 0.0
    %1169 = vmatprep.subr.mxu0 0.0
    %1170 = vmatpush1.msra.mxu0 0.0
    %1171 = vmatprep.subr.mxu0 0.0
    %1172 = vmatpush1.msra.mxu0 0.0
    %1173 = vmatprep.subr.mxu0 0.0
    %1174 = vmatpush1.msra.mxu0 0.0
    %1175 = vmatprep.subr.mxu0 0.0
    %1176 = vmatpush1.msra.mxu0 0.0
    %1177 = vmatprep.subr.mxu0 0.0
    %1178 = vmatpush1.msra.mxu0 0.0
    %1179 = vmatprep.subr.mxu0 0.0
    %1180 = vmatpush1.msra.mxu0 0.0
    %1181 = vmatprep.subr.mxu0 0.0
    %1182 = vmatpush1.msra.mxu0 0.0
    %1183 = vmatprep.subr.mxu0 0.0
    %1184 = vmatpush1.msra.mxu0 0.0
    %1185 = vmatprep.subr.mxu0 0.0
    %1186 = vmatpush1.msra.mxu0 0.0
    %1187 = vmatprep.subr.mxu0 0.0
    %1188 = vmatpush1.msra.mxu0 0.0
    %1189 = vmatprep.subr.mxu0 0.0
    %1190 = vmatpush1.msra.mxu0 0.0
    %1191 = vmatprep.subr.mxu0 0.0
    %1192 = vmatpush1.msra.mxu0 0.0
    %1193 = vmatprep.mubr.f32.mxu0 0.0
    %1194 = vmatmul.mubr.f32.gmra.mrb[0].mxu0 %v1127
    %v1195 = vpop.f32.mrb[0].mxu0
    %v1196 = vadd.f32 0.0, %v1195
    %v1197 = vpop.f32.mrb[0].mxu0
    %1198 = vdwg.mxu0
    %v1199 = vld [vmem:[%s3] sm:$0x1]
    %s1200 = scalar_lea.vmem %s3, 1
    %v1201 = vld [vmem:[%s1200] sm:$0x1]
    %s1202 = scalar_lea.vmem %s3, 2
    %v1203 = vld [vmem:[%s1202] sm:$0x1]
    %v1205 = vlaneseq
    %v1206 = vshrl.u32 %v1205, 7
    %v1207 = vsub.s32 0, %v1206
    %v1208 = vrot.slane %v1199, %v1207
    %v1210 = vadd.f32 %v18, %v1208
    %v1211 = vld [vmem:[%s2] sm:$0xff]
    %v1212 = vld [vmem:[%s2 + $0x8] sm:$0xff]
    %v1214 = vsel %vm284, %v977, 0
    %1216 = vmatprep.subr.mxu0 0.0
    %1217 = vmatpush1.msra.mxu0 %v1211
    %1218 = vmatprep.subr.mxu0 0.0
    %1219 = vmatpush1.msra.mxu0 %v1212
    %1220 = vmatprep.subr.mxu0 0.0
    %1221 = vmatpush1.msra.mxu0 0.0
    %1222 = vmatprep.subr.mxu0 0.0
    %1223 = vmatpush1.msra.mxu0 0.0
    %1224 = vmatprep.subr.mxu0 0.0
    %1225 = vmatpush1.msra.mxu0 0.0
    %1226 = vmatprep.subr.mxu0 0.0
    %1227 = vmatpush1.msra.mxu0 0.0
    %1228 = vmatprep.subr.mxu0 0.0
    %1229 = vmatpush1.msra.mxu0 0.0
    %1230 = vmatprep.subr.mxu0 0.0
    %1231 = vmatpush1.msra.mxu0 0.0
    %1232 = vmatprep.subr.mxu0 0.0
    %1233 = vmatpush1.msra.mxu0 0.0
    %1234 = vmatprep.subr.mxu0 0.0
    %1235 = vmatpush1.msra.mxu0 0.0
    %1236 = vmatprep.subr.mxu0 0.0
    %1237 = vmatpush1.msra.mxu0 0.0
    %1238 = vmatprep.subr.mxu0 0.0
    %1239 = vmatpush1.msra.mxu0 0.0
    %1240 = vmatprep.subr.mxu0 0.0
    %1241 = vmatpush1.msra.mxu0 0.0
    %1242 = vmatprep.subr.mxu0 0.0
    %1243 = vmatpush1.msra.mxu0 0.0
    %1244 = vmatprep.subr.mxu0 0.0
    %1245 = vmatpush1.msra.mxu0 0.0
    %1246 = vmatprep.subr.mxu0 0.0
    %1247 = vmatpush1.msra.mxu0 0.0
    %1248 = vmatprep.subr.mxu0 0.0
    %1249 = vmatpush1.msra.mxu0 0.0
    %1250 = vmatprep.subr.mxu0 0.0
    %1251 = vmatpush1.msra.mxu0 0.0
    %1252 = vmatprep.subr.mxu0 0.0
    %1253 = vmatpush1.msra.mxu0 0.0
    %1254 = vmatprep.subr.mxu0 0.0
    %1255 = vmatpush1.msra.mxu0 0.0
    %1256 = vmatprep.subr.mxu0 0.0
    %1257 = vmatpush1.msra.mxu0 0.0
    %1258 = vmatprep.subr.mxu0 0.0
    %1259 = vmatpush1.msra.mxu0 0.0
    %1260 = vmatprep.subr.mxu0 0.0
    %1261 = vmatpush1.msra.mxu0 0.0
    %1262 = vmatprep.subr.mxu0 0.0
    %1263 = vmatpush1.msra.mxu0 0.0
    %1264 = vmatprep.subr.mxu0 0.0
    %1265 = vmatpush1.msra.mxu0 0.0
    %1266 = vmatprep.subr.mxu0 0.0
    %1267 = vmatpush1.msra.mxu0 0.0
    %1268 = vmatprep.subr.mxu0 0.0
    %1269 = vmatpush1.msra.mxu0 0.0
    %1270 = vmatprep.subr.mxu0 0.0
    %1271 = vmatpush1.msra.mxu0 0.0
    %1272 = vmatprep.subr.mxu0 0.0
    %1273 = vmatpush1.msra.mxu0 0.0
    %1274 = vmatprep.subr.mxu0 0.0
    %1275 = vmatpush1.msra.mxu0 0.0
    %1276 = vmatprep.subr.mxu0 0.0
    %1277 = vmatpush1.msra.mxu0 0.0
    %1278 = vmatprep.subr.mxu0 0.0
    %1279 = vmatpush1.msra.mxu0 0.0
    %1280 = vmatprep.mubr.f32.mxu0 0.0
    %1281 = vmatmul.mubr.f32.gmra.mrb[0].mxu0 %v1214
    %v1282 = vpop.f32.mrb[0].mxu0
    %v1283 = vadd.f32 0.0, %v1282
    %v1284 = vpop.f32.mrb[0].mxu0
    %1285 = vdwg.mxu0
    %v1286 = vadd.f32 %v1210, %v1283
    %s1287 = scalar_lea.vmem %s2, 16
    %v1288 = vld [vmem:[%s1287] sm:$0xff]
    %v1289 = vld [vmem:[%s1287 + $0x8] sm:$0xff]
    %v1291 = vsel %vm284, %v1123, 0
    %1293 = vmatprep.subr.mxu0 0.0
    %1294 = vmatpush1.msra.mxu0 %v1288
    %1295 = vmatprep.subr.mxu0 0.0
    %1296 = vmatpush1.msra.mxu0 %v1289
    %1297 = vmatprep.subr.mxu0 0.0
    %1298 = vmatpush1.msra.mxu0 0.0
    %1299 = vmatprep.subr.mxu0 0.0
    %1300 = vmatpush1.msra.mxu0 0.0
    %1301 = vmatprep.subr.mxu0 0.0
    %1302 = vmatpush1.msra.mxu0 0.0
    %1303 = vmatprep.subr.mxu0 0.0
    %1304 = vmatpush1.msra.mxu0 0.0
    %1305 = vmatprep.subr.mxu0 0.0
    %1306 = vmatpush1.msra.mxu0 0.0
    %1307 = vmatprep.subr.mxu0 0.0
    %1308 = vmatpush1.msra.mxu0 0.0
    %1309 = vmatprep.subr.mxu0 0.0
    %1310 = vmatpush1.msra.mxu0 0.0
    %1311 = vmatprep.subr.mxu0 0.0
    %1312 = vmatpush1.msra.mxu0 0.0
    %1313 = vmatprep.subr.mxu0 0.0
    %1314 = vmatpush1.msra.mxu0 0.0
    %1315 = vmatprep.subr.mxu0 0.0
    %1316 = vmatpush1.msra.mxu0 0.0
    %1317 = vmatprep.subr.mxu0 0.0
    %1318 = vmatpush1.msra.mxu0 0.0
    %1319 = vmatprep.subr.mxu0 0.0
    %1320 = vmatpush1.msra.mxu0 0.0
    %1321 = vmatprep.subr.mxu0 0.0
    %1322 = vmatpush1.msra.mxu0 0.0
    %1323 = vmatprep.subr.mxu0 0.0
    %1324 = vmatpush1.msra.mxu0 0.0
    %1325 = vmatprep.subr.mxu0 0.0
    %1326 = vmatpush1.msra.mxu0 0.0
    %1327 = vmatprep.subr.mxu0 0.0
    %1328 = vmatpush1.msra.mxu0 0.0
    %1329 = vmatprep.subr.mxu0 0.0
    %1330 = vmatpush1.msra.mxu0 0.0
    %1331 = vmatprep.subr.mxu0 0.0
    %1332 = vmatpush1.msra.mxu0 0.0
    %1333 = vmatprep.subr.mxu0 0.0
    %1334 = vmatpush1.msra.mxu0 0.0
    %1335 = vmatprep.subr.mxu0 0.0
    %1336 = vmatpush1.msra.mxu0 0.0
    %1337 = vmatprep.subr.mxu0 0.0
    %1338 = vmatpush1.msra.mxu0 0.0
    %1339 = vmatprep.subr.mxu0 0.0
    %1340 = vmatpush1.msra.mxu0 0.0
    %1341 = vmatprep.subr.mxu0 0.0
    %1342 = vmatpush1.msra.mxu0 0.0
    %1343 = vmatprep.subr.mxu0 0.0
    %1344 = vmatpush1.msra.mxu0 0.0
    %1345 = vmatprep.subr.mxu0 0.0
    %1346 = vmatpush1.msra.mxu0 0.0
    %1347 = vmatprep.subr.mxu0 0.0
    %1348 = vmatpush1.msra.mxu0 0.0
    %1349 = vmatprep.subr.mxu0 0.0
    %1350 = vmatpush1.msra.mxu0 0.0
    %1351 = vmatprep.subr.mxu0 0.0
    %1352 = vmatpush1.msra.mxu0 0.0
    %1353 = vmatprep.subr.mxu0 0.0
    %1354 = vmatpush1.msra.mxu0 0.0
    %1355 = vmatprep.subr.mxu0 0.0
    %1356 = vmatpush1.msra.mxu0 0.0
    %1357 = vmatprep.mubr.f32.mxu0 0.0
    %1358 = vmatmul.mubr.f32.gmra.mrb[0].mxu0 %v1291
    %v1359 = vpop.f32.mrb[0].mxu0
    %v1360 = vadd.f32 0.0, %v1359
    %v1361 = vpop.f32.mrb[0].mxu0
    %1362 = vdwg.mxu0
    %v1363 = vadd.f32 %v1286, %v1360
    %v1364 = vsel %vm30, %v1363, 0.0
    %1365 = vadd.xlane.f32.xlu0 %v1364
    %v1366 = vpop.xlane.xlu0 %1365
    %v1367 = vmul.f32 %v1363, %v1363
    %v1368 = vsel %vm30, %v1367, 0.0
    %1369 = vadd.xlane.f32.xlu0 %v1368
    %v1370 = vpop.xlane.xlu0 %1369
    %v1371 = vmul.f32 %v1366, 0.03125
    %v1372 = vmul.f32 %v1370, 0.03125
    %v1373 = vmul.f32 %v1371, %v1371
    %v1374 = vsub.f32 %v1372, %v1373
    %v1375 = vsub.f32 %v1363, %v1371
    %v1376 = vadd.f32 %v1374, 1e-05
    %v1377 = vrsqrt.pop %v1376
    %v1378 = vmul.f32 %v1375, %v1377
    %v1380 = vlaneseq
    %v1381 = vshrl.u32 %v1380, 7
    %v1382 = vsub.s32 0, %v1381
    %v1383 = vrot.slane %v1201, %v1382
    %v1385 = vmul.f32 %v1378, %v1383
    %v1387 = vlaneseq
    %v1388 = vshrl.u32 %v1387, 7
    %v1389 = vsub.s32 0, %v1388
    %v1390 = vrot.slane %v1203, %v1389
    %v1392 = vadd.f32 %v1385, %v1390
    %1393 = vst.msk [vmem:[#allocation5] sm:$0xff] %vm30, %v1392
    %v1394 = vadd.f32 %v19, %v1208
    %v1395 = vld [vmem:[%s2] sm:$0xff]
    %v1396 = vld [vmem:[%s2 + $0x8] sm:$0xff]
    %v1398 = vsel %vm284, %v1050, 0
    %1400 = vmatprep.subr.mxu0 0.0
    %1401 = vmatpush1.msra.mxu0 %v1395
    %1402 = vmatprep.subr.mxu0 0.0
    %1403 = vmatpush1.msra.mxu0 %v1396
    %1404 = vmatprep.subr.mxu0 0.0
    %1405 = vmatpush1.msra.mxu0 0.0
    %1406 = vmatprep.subr.mxu0 0.0
    %1407 = vmatpush1.msra.mxu0 0.0
    %1408 = vmatprep.subr.mxu0 0.0
    %1409 = vmatpush1.msra.mxu0 0.0
    %1410 = vmatprep.subr.mxu0 0.0
    %1411 = vmatpush1.msra.mxu0 0.0
    %1412 = vmatprep.subr.mxu0 0.0
    %1413 = vmatpush1.msra.mxu0 0.0
    %1414 = vmatprep.subr.mxu0 0.0
    %1415 = vmatpush1.msra.mxu0 0.0
    %1416 = vmatprep.subr.mxu0 0.0
    %1417 = vmatpush1.msra.mxu0 0.0
    %1418 = vmatprep.subr.mxu0 0.0
    %1419 = vmatpush1.msra.mxu0 0.0
    %1420 = vmatprep.subr.mxu0 0.0
    %1421 = vmatpush1.msra.mxu0 0.0
    %1422 = vmatprep.subr.mxu0 0.0
    %1423 = vmatpush1.msra.mxu0 0.0
    %1424 = vmatprep.subr.mxu0 0.0
    %1425 = vmatpush1.msra.mxu0 0.0
    %1426 = vmatprep.subr.mxu0 0.0
    %1427 = vmatpush1.msra.mxu0 0.0
    %1428 = vmatprep.subr.mxu0 0.0
    %1429 = vmatpush1.msra.mxu0 0.0
    %1430 = vmatprep.subr.mxu0 0.0
    %1431 = vmatpush1.msra.mxu0 0.0
    %1432 = vmatprep.subr.mxu0 0.0
    %1433 = vmatpush1.msra.mxu0 0.0
    %1434 = vmatprep.subr.mxu0 0.0
    %1435 = vmatpush1.msra.mxu0 0.0
    %1436 = vmatprep.subr.mxu0 0.0
    %1437 = vmatpush1.msra.mxu0 0.0
    %1438 = vmatprep.subr.mxu0 0.0
    %1439 = vmatpush1.msra.mxu0 0.0
    %1440 = vmatprep.subr.mxu0 0.0
    %1441 = vmatpush1.msra.mxu0 0.0
    %1442 = vmatprep.subr.mxu0 0.0
    %1443 = vmatpush1.msra.mxu0 0.0
    %1444 = vmatprep.subr.mxu0 0.0
    %1445 = vmatpush1.msra.mxu0 0.0
    %1446 = vmatprep.subr.mxu0 0.0
    %1447 = vmatpush1.msra.mxu0 0.0
    %1448 = vmatprep.subr.mxu0 0.0
    %1449 = vmatpush1.msra.mxu0 0.0
    %1450 = vmatprep.subr.mxu0 0.0
    %1451 = vmatpush1.msra.mxu0 0.0
    %1452 = vmatprep.subr.mxu0 0.0
    %1453 = vmatpush1.msra.mxu0 0.0
    %1454 = vmatprep.subr.mxu0 0.0
    %1455 = vmatpush1.msra.mxu0 0.0
    %1456 = vmatprep.subr.mxu0 0.0
    %1457 = vmatpush1.msra.mxu0 0.0
    %1458 = vmatprep.subr.mxu0 0.0
    %1459 = vmatpush1.msra.mxu0 0.0
    %1460 = vmatprep.subr.mxu0 0.0
    %1461 = vmatpush1.msra.mxu0 0.0
    %1462 = vmatprep.subr.mxu0 0.0
    %1463 = vmatpush1.msra.mxu0 0.0
    %1464 = vmatprep.mubr.f32.mxu0 0.0
    %1465 = vmatmul.mubr.f32.gmra.mrb[0].mxu0 %v1398
    %v1466 = vpop.f32.mrb[0].mxu0
    %v1467 = vadd.f32 0.0, %v1466
    %v1468 = vpop.f32.mrb[0].mxu0
    %1469 = vdwg.mxu0
    %v1470 = vadd.f32 %v1394, %v1467
    %v1471 = vld [vmem:[%s1287] sm:$0xff]
    %v1472 = vld [vmem:[%s1287 + $0x8] sm:$0xff]
    %v1474 = vsel %vm284, %v1196, 0
    %1476 = vmatprep.subr.mxu0 0.0
    %1477 = vmatpush1.msra.mxu0 %v1471
    %1478 = vmatprep.subr.mxu0 0.0
    %1479 = vmatpush1.msra.mxu0 %v1472
    %1480 = vmatprep.subr.mxu0 0.0
    %1481 = vmatpush1.msra.mxu0 0.0
    %1482 = vmatprep.subr.mxu0 0.0
    %1483 = vmatpush1.msra.mxu0 0.0
    %1484 = vmatprep.subr.mxu0 0.0
    %1485 = vmatpush1.msra.mxu0 0.0
    %1486 = vmatprep.subr.mxu0 0.0
    %1487 = vmatpush1.msra.mxu0 0.0
    %1488 = vmatprep.subr.mxu0 0.0
    %1489 = vmatpush1.msra.mxu0 0.0
    %1490 = vmatprep.subr.mxu0 0.0
    %1491 = vmatpush1.msra.mxu0 0.0
    %1492 = vmatprep.subr.mxu0 0.0
    %1493 = vmatpush1.msra.mxu0 0.0
    %1494 = vmatprep.subr.mxu0 0.0
    %1495 = vmatpush1.msra.mxu0 0.0
    %1496 = vmatprep.subr.mxu0 0.0
    %1497 = vmatpush1.msra.mxu0 0.0
    %1498 = vmatprep.subr.mxu0 0.0
    %1499 = vmatpush1.msra.mxu0 0.0
    %1500 = vmatprep.subr.mxu0 0.0
    %1501 = vmatpush1.msra.mxu0 0.0
    %1502 = vmatprep.subr.mxu0 0.0
    %1503 = vmatpush1.msra.mxu0 0.0
    %1504 = vmatprep.subr.mxu0 0.0
    %1505 = vmatpush1.msra.mxu0 0.0
    %1506 = vmatprep.subr.mxu0 0.0
    %1507 = vmatpush1.msra.mxu0 0.0
    %1508 = vmatprep.subr.mxu0 0.0
    %1509 = vmatpush1.msra.mxu0 0.0
    %1510 = vmatprep.subr.mxu0 0.0
    %1511 = vmatpush1.msra.mxu0 0.0
    %1512 = vmatprep.subr.mxu0 0.0
    %1513 = vmatpush1.msra.mxu0 0.0
    %1514 = vmatprep.subr.mxu0 0.0
    %1515 = vmatpush1.msra.mxu0 0.0
    %1516 = vmatprep.subr.mxu0 0.0
    %1517 = vmatpush1.msra.mxu0 0.0
    %1518 = vmatprep.subr.mxu0 0.0
    %1519 = vmatpush1.msra.mxu0 0.0
    %1520 = vmatprep.subr.mxu0 0.0
    %1521 = vmatpush1.msra.mxu0 0.0
    %1522 = vmatprep.subr.mxu0 0.0
    %1523 = vmatpush1.msra.mxu0 0.0
    %1524 = vmatprep.subr.mxu0 0.0
    %1525 = vmatpush1.msra.mxu0 0.0
    %1526 = vmatprep.subr.mxu0 0.0
    %1527 = vmatpush1.msra.mxu0 0.0
    %1528 = vmatprep.subr.mxu0 0.0
    %1529 = vmatpush1.msra.mxu0 0.0
    %1530 = vmatprep.subr.mxu0 0.0
    %1531 = vmatpush1.msra.mxu0 0.0
    %1532 = vmatprep.subr.mxu0 0.0
    %1533 = vmatpush1.msra.mxu0 0.0
    %1534 = vmatprep.subr.mxu0 0.0
    %1535 = vmatpush1.msra.mxu0 0.0
    %1536 = vmatprep.subr.mxu0 0.0
    %1537 = vmatpush1.msra.mxu0 0.0
    %1538 = vmatprep.subr.mxu0 0.0
    %1539 = vmatpush1.msra.mxu0 0.0
    %1540 = vmatprep.mubr.f32.mxu0 0.0
    %1541 = vmatmul.mubr.f32.gmra.mrb[0].mxu0 %v1474
    %v1542 = vpop.f32.mrb[0].mxu0
    %v1543 = vadd.f32 0.0, %v1542
    %v1544 = vpop.f32.mrb[0].mxu0
    %1545 = vdwg.mxu0
    %v1546 = vadd.f32 %v1470, %v1543
    %v1547 = vsel %vm30, %v1546, 0.0
    %1548 = vadd.xlane.f32.xlu0 %v1547
    %v1549 = vpop.xlane.xlu0 %1548
    %v1550 = vmul.f32 %v1546, %v1546
    %v1551 = vsel %vm30, %v1550, 0.0
    %1552 = vadd.xlane.f32.xlu0 %v1551
    %v1553 = vpop.xlane.xlu0 %1552
    %v1554 = vmul.f32 %v1549, 0.03125
    %v1555 = vmul.f32 %v1553, 0.03125
    %v1556 = vmul.f32 %v1554, %v1554
    %v1557 = vsub.f32 %v1555, %v1556
    %v1558 = vsub.f32 %v1546, %v1554
    %v1559 = vadd.f32 %v1557, 1e-05
    %v1560 = vrsqrt.pop %v1559
    %v1561 = vmul.f32 %v1558, %v1560
    %v1562 = vmul.f32 %v1561, %v1383
    %v1563 = vadd.f32 %v1562, %v1390
    %1564 = vst.msk [vmem:[#allocation5 + $0x8] sm:$0xff] %vm30, %v1563
    // Predicated region
    $region18: #{multi_head_attention.1} parent=1 // pred_check
      _
    $region19: #{multi_head_attention.1} parent=1 // pred_check_branch
      %1566 = sbr.rel (0) target = $region21
    $region20: #{multi_head_attention.1} parent=1 // pred_region
      %s1568 = ssub.s32 256, 256
      %1569 = vsyncadd [#allocation6], %s1568
      %s1570 = sshll.u32 [#allocation5], 4
      %s1571 = int_to_ptr.vmem [resolvable:$true] %s1570
      %1576 = dma.vmem_to_hbm [thread:$0]  %s1571, 256, %s4, [#allocation6], 128, 128, 8
    $region21: #{multi_head_attention.1} parent=1 // pred_fallthru
      _
    // Predicated region
    $region22: #{multi_head_attention.1} parent=1 // pred_check
      _
    $region23: #{multi_head_attention.1} parent=1 // pred_check_branch
      %1578 = sbr.rel (0) target = $region25
    $region24: #{multi_head_attention.1} parent=1 // pred_region
      %1579 = dma.done [#allocation6], 256
    $region25: #{multi_head_attention.1} parent=1 // pred_fallthru
      _
    %1580 = vsyncpa [#allocation6], 1

</llo_original>
